<compile_context>
chip_gen: v5e
topology: v5e:2x2
jax: 0.10.0
libtpu: 0.0.40
codegen_flags: <defaults>
</compile_context>

<pallas_src>
import functools

import jax
import jax.numpy as jnp
from jax import lax
from jax.experimental import pallas as pl
from jax.experimental.pallas import tpu as pltpu


# ----------------------------------------------------------------------------
# Fused Pallas kernel: the entire BaseLearner chain in one kernel body.
# ----------------------------------------------------------------------------
def fused_base_learner_kernel(*refs, num_layers, eps, inv_rows):
    """refs = (x_ref, w0_ref, p0_ref, w1_ref, p1_ref, ..., o_ref).

    x_ref : (R, Cin)        bf16 channels-last rows
    wi_ref: (Cin_i, Cout_i) bf16 1x1-conv weight
    pi_ref: (3, Cout_i)     f32  packed [bias; gamma; beta]
    o_ref : (R, Cout_pad)   f32  lane-dense output
    """
    x_ref = refs[0]
    o_ref = refs[-1]

    h = x_ref[...]                                     # bf16 (R, Cin)
    for i in range(num_layers):
        w = refs[1 + 2 * i][...]                       # bf16 (Cin_i, Cout_i)
        p = refs[2 + 2 * i][...]                       # f32  (3, Cout_i)
        bias, gamma, beta = p[0:1, :], p[1:2, :], p[2:3, :]

        # 1x1 conv == matmul on the MXU; f32 accumulation.  Bias is NOT added
        # to the full array: training-mode BN subtracts the batch mean, so a
        # per-channel constant cancels exactly; it is folded into `shift`.
        y = jnp.dot(h, w, preferred_element_type=jnp.float32)   # f32 (R, Cout)

        # One-pass batch statistics (biased variance), f32 math, per-channel.
        mean = jnp.sum(y, axis=0, keepdims=True) * inv_rows         # E[y]
        ex2 = jnp.sum(y * y, axis=0, keepdims=True) * inv_rows      # E[y^2]
        var = jnp.maximum(ex2 - mean * mean, 0.0)

        # Fold BN (and the cancelled conv bias) into one per-channel affine.
        scale = gamma * lax.rsqrt(var + eps)                        # (1, Cout)
        shift = beta + (bias - (mean + bias)) * scale               # == beta - mean*scale

        y = y * scale + shift                                       # single fused affine
        if i != num_layers - 1:
            h = jnp.maximum(y, 0.0).astype(jnp.bfloat16)   # ReLU between layers, bf16 for next MXU pass
        else:
            h = y

    o_ref[...] = h.astype(o_ref.dtype)


# ----------------------------------------------------------------------------
# Wrapper
# ----------------------------------------------------------------------------
def _pad_lanes(a, target, axis):
    pad = target - a.shape[axis]
    if pad <= 0:
        return a
    widths = [(0, 0)] * a.ndim
    widths[axis] = (0, pad)
    return jnp.pad(a, widths)


def base_learner_forward(x_ncl, layers):
    """x: (B, C_in, L) NCL; layers: list of {'w': (Cin,Cout) bf16, 'p': (3,Cout) f32}.

    Returns (B, C_out_last, L), matching BaseLearner.forward.
    """
    B, Cin, L = x_ncl.shape
    R = B * L
    num_layers = len(layers)
    Cout = layers[-1]["w"].shape[1]
    # Lane-dense output store: pad final channel dim to a multiple of 128.
    Cout_pad = ((Cout + 127) // 128) * 128

    rows = jnp.transpose(x_ncl, (0, 2, 1)).reshape(R, Cin).astype(jnp.bfloat16)

    args = [rows]
    in_specs = [pl.BlockSpec((R, Cin), lambda i: (0, 0))]
    for li, layer in enumerate(layers):
        w, p = layer["w"], layer["p"]
        if li == num_layers - 1 and Cout_pad != Cout:
            # Zero-pad weight columns / BN params: padded channels stay exactly 0.
            w = _pad_lanes(w, Cout_pad, axis=1)
            p = _pad_lanes(p, Cout_pad, axis=1)
        ci, co = w.shape
        args.append(w)
        args.append(p)
        in_specs.append(pl.BlockSpec((ci, co), lambda i: (0, 0)))
        in_specs.append(pl.BlockSpec((3, co), lambda i: (0, 0)))

    kern = functools.partial(fused_base_learner_kernel,
                             num_layers=num_layers, eps=1e-5,
                             inv_rows=1.0 / float(R))
    out = pl.pallas_call(
        kern,
        out_shape=jax.ShapeDtypeStruct((R, Cout_pad), jnp.float32),
        grid=(1,),
        in_specs=in_specs,
        out_specs=pl.BlockSpec((R, Cout_pad), lambda i: (0, 0)),
        compiler_params=pltpu.CompilerParams(
            dimension_semantics=("arbitrary",),   # BN batch stats => single sequential step
        ),
    )(*args)

    out = out[:, :Cout]                                          # drop lane padding
    return jnp.transpose(out.reshape(B, L, Cout), (0, 2, 1))     # back to NCL


# ----------------------------------------------------------------------------
# Pure-JAX f32 reference (loose numerical check against bf16 matmuls)
# ----------------------------------------------------------------------------
def base_learner_reference(x_ncl, layers):
    B, Cin, L = x_ncl.shape
    h = jnp.transpose(x_ncl, (0, 2, 1)).reshape(B * L, Cin).astype(jnp.float32)
    n = len(layers)
    for i, layer in enumerate(layers):
        w = layer["w"].astype(jnp.float32)
        b, g, beta = layer["p"][0], layer["p"][1], layer["p"][2]
        y = h @ w + b
        mean = jnp.mean(y, axis=0, keepdims=True)
        var = jnp.mean((y - mean) ** 2, axis=0, keepdims=True)
        y = (y - mean) / jnp.sqrt(var + 1e-5)
        y = g * y + beta
        if i != n - 1:
            y = jnp.maximum(y, 0.0)
        h = y
    Cout = layers[-1]["w"].shape[1]
    return jnp.transpose(h.reshape(B, L, Cout), (0, 2, 1))


# ----------------------------------------------------------------------------
# Main
# ----------------------------------------------------------------------------
if __name__ == "__main__":
    # BaseLearner(in_channels=128, params=[128, 64]) on (B, 128, L) point features,
    # matching the DPA usage (base_widths ending in 64) at small demo sizes.
    B, C_IN, L = 2, 128, 512
    WIDTHS = (128, 64)

    key = jax.random.PRNGKey(0)
    keys = jax.random.split(key, 1 + 2 * len(WIDTHS))
    kx, kws = keys[0], keys[1:]

    layers = []
    cin = C_IN
    for i, cout in enumerate(WIDTHS):
        kw, kb = kws[2 * i], kws[2 * i + 1]
        w = jax.random.normal(kw, (cin, cout), jnp.float32) * 0.1
        b = jax.random.normal(kb, (cout,), jnp.float32) * 0.1
        gamma = jnp.ones((cout,), jnp.float32)     # BN affine defaults
        beta = jnp.zeros((cout,), jnp.float32)
        layers.append({
            "w": w.astype(jnp.bfloat16),                 # bf16 MXU operand
            "p": jnp.stack([b, gamma, beta], axis=0),    # packed (3, Cout) f32
        })
        cin = cout

    x = jax.random.normal(kx, (B, C_IN, L), jnp.float32)

    fwd = jax.jit(base_learner_forward)
    out = fwd(x, layers)
    jax.block_until_ready(out)

    assert out.shape == (B, WIDTHS[-1], L), out.shape
    assert bool(jnp.all(jnp.isfinite(out)))

    ref = base_learner_reference(x, layers)
    max_err = float(jnp.max(jnp.abs(out - ref)))
    assert max_err < 0.2, f"max abs error {max_err} too large vs f32 reference"

    print("KERNEL_OK")
</pallas_src>

<mosaic_0001>
module attributes {stable_mosaic.version = 11 : i64} {
  func.func @fused_base_learner_kernel(%arg0: i32, %arg1: memref<1024x128xbf16, #tpu.memory_space<vmem>>, %arg2: memref<128x128xbf16, #tpu.memory_space<vmem>>, %arg3: memref<3x128xf32, #tpu.memory_space<vmem>>, %arg4: memref<128x128xbf16, #tpu.memory_space<vmem>>, %arg5: memref<3x128xf32, #tpu.memory_space<vmem>>, %arg6: memref<1024x128xf32, #tpu.memory_space<vmem>>) attributes {dimension_semantics = [#tpu.dimension_semantics<arbitrary>], iteration_bounds = array<i64: 1>, scalar_prefetch = 0 : i64, scratch_operands = 0 : i64, tpu.core_type = #tpu.core_type<tc>, window_params = [{pipeline_mode = #tpu.pipeline_mode<synchronous>, transform_indices = @transform_0, window_bounds = array<i64: 1024, 128>}, {pipeline_mode = #tpu.pipeline_mode<synchronous>, transform_indices = @transform_1, window_bounds = array<i64: 128, 128>}, {pipeline_mode = #tpu.pipeline_mode<synchronous>, transform_indices = @transform_2, window_bounds = array<i64: 3, 128>}, {pipeline_mode = #tpu.pipeline_mode<synchronous>, transform_indices = @transform_3, window_bounds = array<i64: 128, 128>}, {pipeline_mode = #tpu.pipeline_mode<synchronous>, transform_indices = @transform_4, window_bounds = array<i64: 3, 128>}, {pipeline_mode = #tpu.pipeline_mode<synchronous>, transform_indices = @transform_5, window_bounds = array<i64: 1024, 128>}]} {
    %c0 = arith.constant 0 : index
    %c0_0 = arith.constant 0 : index
    %0 = vector.load %arg1[%c0, %c0_0] : memref<1024x128xbf16, #tpu.memory_space<vmem>>, vector<1024x128xbf16>
    %c0_1 = arith.constant 0 : index
    %c0_2 = arith.constant 0 : index
    %1 = vector.load %arg2[%c0_1, %c0_2] : memref<128x128xbf16, #tpu.memory_space<vmem>>, vector<128x128xbf16>
    %c0_3 = arith.constant 0 : index
    %c0_4 = arith.constant 0 : index
    %2 = vector.load %arg3[%c0_3, %c0_4] : memref<3x128xf32, #tpu.memory_space<vmem>>, vector<3x128xf32>
    %3 = vector.extract_strided_slice %2 {offsets = [0, 0], sizes = [1, 128], strides = [1, 1]} : vector<3x128xf32> to vector<1x128xf32>
    %4 = vector.extract_strided_slice %2 {offsets = [1, 0], sizes = [1, 128], strides = [1, 1]} : vector<3x128xf32> to vector<1x128xf32>
    %5 = vector.extract_strided_slice %2 {offsets = [2, 0], sizes = [1, 128], strides = [1, 1]} : vector<3x128xf32> to vector<1x128xf32>
    %cst = arith.constant dense<0.000000e+00> : vector<1024x128xf32>
    %6 = tpu.matmul %0, %1, %cst {dimension_numbers = #tpu.dot_dimension_numbers<[1], [0], [0], [1], [0, 0, 1, 1], [], []>} : vector<1024x128xbf16>, vector<128x128xbf16>, vector<1024x128xf32> -> vector<1024x128xf32>
    %cst_5 = arith.constant dense<0.000000e+00> : vector<128xf32>
    %7 = vector.multi_reduction <add>, %6, %cst_5 [0] : vector<1024x128xf32> to vector<128xf32>
    %8 = vector.shape_cast %7 : vector<128xf32> to vector<1x128xf32>
    %cst_6 = arith.constant 9.765625E-4 : f32
    %9 = vector.broadcast %cst_6 : f32 to vector<1x128xf32>
    %10 = arith.mulf %8, %9 : vector<1x128xf32>
    %11 = arith.mulf %6, %6 : vector<1024x128xf32>
    %cst_7 = arith.constant dense<0.000000e+00> : vector<128xf32>
    %12 = vector.multi_reduction <add>, %11, %cst_7 [0] : vector<1024x128xf32> to vector<128xf32>
    %13 = vector.shape_cast %12 : vector<128xf32> to vector<1x128xf32>
    %cst_8 = arith.constant 9.765625E-4 : f32
    %14 = vector.broadcast %cst_8 : f32 to vector<1x128xf32>
    %15 = arith.mulf %13, %14 : vector<1x128xf32>
    %16 = arith.mulf %10, %10 : vector<1x128xf32>
    %17 = arith.subf %15, %16 : vector<1x128xf32>
    %cst_9 = arith.constant 0.000000e+00 : f32
    %18 = vector.broadcast %cst_9 : f32 to vector<1x128xf32>
    %19 = arith.maximumf %17, %18 : vector<1x128xf32>
    %cst_10 = arith.constant 9.99999974E-6 : f32
    %20 = vector.broadcast %cst_10 : f32 to vector<1x128xf32>
    %21 = arith.addf %19, %20 : vector<1x128xf32>
    %22 = math.rsqrt %21 : vector<1x128xf32>
    %23 = arith.mulf %4, %22 : vector<1x128xf32>
    %24 = arith.addf %10, %3 : vector<1x128xf32>
    %25 = arith.subf %3, %24 : vector<1x128xf32>
    %26 = arith.mulf %25, %23 : vector<1x128xf32>
    %27 = arith.addf %5, %26 : vector<1x128xf32>
    %28 = vector.broadcast %23 : vector<1x128xf32> to vector<1024x128xf32>
    %29 = arith.mulf %6, %28 : vector<1024x128xf32>
    %30 = vector.broadcast %27 : vector<1x128xf32> to vector<1024x128xf32>
    %31 = arith.addf %29, %30 : vector<1024x128xf32>
    %cst_11 = arith.constant 0.000000e+00 : f32
    %32 = vector.broadcast %cst_11 : f32 to vector<1024x128xf32>
    %33 = arith.maximumf %31, %32 : vector<1024x128xf32>
    %34 = arith.truncf %33 : vector<1024x128xf32> to vector<1024x128xbf16>
    %c0_12 = arith.constant 0 : index
    %c0_13 = arith.constant 0 : index
    %35 = vector.load %arg4[%c0_12, %c0_13] : memref<128x128xbf16, #tpu.memory_space<vmem>>, vector<128x128xbf16>
    %c0_14 = arith.constant 0 : index
    %c0_15 = arith.constant 0 : index
    %36 = vector.load %arg5[%c0_14, %c0_15] : memref<3x128xf32, #tpu.memory_space<vmem>>, vector<3x128xf32>
    %37 = vector.extract_strided_slice %36 {offsets = [0, 0], sizes = [1, 128], strides = [1, 1]} : vector<3x128xf32> to vector<1x128xf32>
    %38 = vector.extract_strided_slice %36 {offsets = [1, 0], sizes = [1, 128], strides = [1, 1]} : vector<3x128xf32> to vector<1x128xf32>
    %39 = vector.extract_strided_slice %36 {offsets = [2, 0], sizes = [1, 128], strides = [1, 1]} : vector<3x128xf32> to vector<1x128xf32>
    %cst_16 = arith.constant dense<0.000000e+00> : vector<1024x128xf32>
    %40 = tpu.matmul %34, %35, %cst_16 {dimension_numbers = #tpu.dot_dimension_numbers<[1], [0], [0], [1], [0, 0, 1, 1], [], []>} : vector<1024x128xbf16>, vector<128x128xbf16>, vector<1024x128xf32> -> vector<1024x128xf32>
    %cst_17 = arith.constant dense<0.000000e+00> : vector<128xf32>
    %41 = vector.multi_reduction <add>, %40, %cst_17 [0] : vector<1024x128xf32> to vector<128xf32>
    %42 = vector.shape_cast %41 : vector<128xf32> to vector<1x128xf32>
    %cst_18 = arith.constant 9.765625E-4 : f32
    %43 = vector.broadcast %cst_18 : f32 to vector<1x128xf32>
    %44 = arith.mulf %42, %43 : vector<1x128xf32>
    %45 = arith.mulf %40, %40 : vector<1024x128xf32>
    %cst_19 = arith.constant dense<0.000000e+00> : vector<128xf32>
    %46 = vector.multi_reduction <add>, %45, %cst_19 [0] : vector<1024x128xf32> to vector<128xf32>
    %47 = vector.shape_cast %46 : vector<128xf32> to vector<1x128xf32>
    %cst_20 = arith.constant 9.765625E-4 : f32
    %48 = vector.broadcast %cst_20 : f32 to vector<1x128xf32>
    %49 = arith.mulf %47, %48 : vector<1x128xf32>
    %50 = arith.mulf %44, %44 : vector<1x128xf32>
    %51 = arith.subf %49, %50 : vector<1x128xf32>
    %cst_21 = arith.constant 0.000000e+00 : f32
    %52 = vector.broadcast %cst_21 : f32 to vector<1x128xf32>
    %53 = arith.maximumf %51, %52 : vector<1x128xf32>
    %cst_22 = arith.constant 9.99999974E-6 : f32
    %54 = vector.broadcast %cst_22 : f32 to vector<1x128xf32>
    %55 = arith.addf %53, %54 : vector<1x128xf32>
    %56 = math.rsqrt %55 : vector<1x128xf32>
    %57 = arith.mulf %38, %56 : vector<1x128xf32>
    %58 = arith.addf %44, %37 : vector<1x128xf32>
    %59 = arith.subf %37, %58 : vector<1x128xf32>
    %60 = arith.mulf %59, %57 : vector<1x128xf32>
    %61 = arith.addf %39, %60 : vector<1x128xf32>
    %62 = vector.broadcast %57 : vector<1x128xf32> to vector<1024x128xf32>
    %63 = arith.mulf %40, %62 : vector<1024x128xf32>
    %64 = vector.broadcast %61 : vector<1x128xf32> to vector<1024x128xf32>
    %65 = arith.addf %63, %64 : vector<1024x128xf32>
    %c0_23 = arith.constant 0 : index
    %c0_24 = arith.constant 0 : index
    %66 = vector.load %arg6[%c0_23, %c0_24] : memref<1024x128xf32, #tpu.memory_space<vmem>>, vector<1024x128xf32>
    tpu.vector_store %arg6[%c0_23, %c0_24], %65 {strides = array<i32>} : memref<1024x128xf32, #tpu.memory_space<vmem>>, vector<1024x128xf32>,
    return
  }
  func.func @transform_0(%arg0: i32) -> (i32, i32) {
    %c0_i32 = arith.constant 0 : i32
    %c0_i32_0 = arith.constant 0 : i32
    %c0_i32_1 = arith.constant 0 : i32
    return %c0_i32, %c0_i32_0 : i32, i32
  }
  func.func @transform_1(%arg0: i32) -> (i32, i32) {
    %c0_i32 = arith.constant 0 : i32
    %c0_i32_0 = arith.constant 0 : i32
    %c0_i32_1 = arith.constant 0 : i32
    return %c0_i32, %c0_i32_0 : i32, i32
  }
  func.func @transform_2(%arg0: i32) -> (i32, i32) {
    %c0_i32 = arith.constant 0 : i32
    %c0_i32_0 = arith.constant 0 : i32
    %c0_i32_1 = arith.constant 0 : i32
    return %c0_i32, %c0_i32_0 : i32, i32
  }
  func.func @transform_3(%arg0: i32) -> (i32, i32) {
    %c0_i32 = arith.constant 0 : i32
    %c0_i32_0 = arith.constant 0 : i32
    %c0_i32_1 = arith.constant 0 : i32
    return %c0_i32, %c0_i32_0 : i32, i32
  }
  func.func @transform_4(%arg0: i32) -> (i32, i32) {
    %c0_i32 = arith.constant 0 : i32
    %c0_i32_0 = arith.constant 0 : i32
    %c0_i32_1 = arith.constant 0 : i32
    return %c0_i32, %c0_i32_0 : i32, i32
  }
  func.func @transform_5(%arg0: i32) -> (i32, i32) {
    %c0_i32 = arith.constant 0 : i32
    %c0_i32_0 = arith.constant 0 : i32
    %c0_i32_1 = arith.constant 0 : i32
    return %c0_i32, %c0_i32_0 : i32, i32
  }
}

</mosaic_0001>

<llo_original>
// kernel: base_learner_forward.1
$region0: #{base_learner_forward.1}
  #allocation0 [shape = 'u32[]', space=smem, size = 0x4, offset = 0x4, fixed_abs, tag = 'smem constant byte address 0x4 - core index']
  #allocation1 [shape = 'u32[72,128]{1,0:T(1,128)}', space=vmem, size = 0x9000, scoped, tag = 'internal scratch']
  %s0 = inlined_call_operand.vmem [shape: bf16[1024,128], index: 0, kind: input, shape index: {}]
  %s1 = inlined_call_operand.vmem [shape: bf16[128,128], index: 1, kind: input, shape index: {}]
  %s2 = inlined_call_operand.vmem [shape: f32[3,128], index: 2, kind: input, shape index: {}]
  %s3 = inlined_call_operand.vmem [shape: bf16[128,128], index: 3, kind: input, shape index: {}]
  %s4 = inlined_call_operand.vmem [shape: f32[3,128], index: 4, kind: input, shape index: {}]
  %s5 = inlined_call_operand.vmem [shape: f32[1024,128], index: 5, kind: output, shape index: {}]
  %s6 = sld [smem:[#allocation0]]
  $region30: #{base_learner_forward.1} parent=0
    _
  %s8 = ssub.s32 1, %s6
  %s9 = scalar_select 0, %s8, %s6
  // Predicated region
  $region2: #{base_learner_forward.1} parent=0 // pred_check
    _
  $region3: #{base_learner_forward.1} parent=0 // pred_check_branch
    %11 = sbr.rel (0) target = $region5
  $region4: #{base_learner_forward.1} parent=0 // pred_region
    _
  $region5: #{base_learner_forward.1} parent=0 // pred_fallthru
    _
  // Predicated region
  $region6: #{base_learner_forward.1} parent=0 // pred_check
    _
  $region7: #{base_learner_forward.1} parent=0 // pred_check_branch
    %13 = sbr.rel (0) target = $region9
  $region8: #{base_learner_forward.1} parent=0 // pred_region
    _
  $region9: #{base_learner_forward.1} parent=0 // pred_fallthru
    _
  // Predicated region
  $region10: #{base_learner_forward.1} parent=0 // pred_check
    _
  $region11: #{base_learner_forward.1} parent=0 // pred_check_branch
    %15 = sbr.rel (0) target = $region13
  $region12: #{base_learner_forward.1} parent=0 // pred_region
    _
  $region13: #{base_learner_forward.1} parent=0 // pred_fallthru
    _
  // Predicated region
  $region14: #{base_learner_forward.1} parent=0 // pred_check
    _
  $region15: #{base_learner_forward.1} parent=0 // pred_check_branch
    %17 = sbr.rel (0) target = $region17
  $region16: #{base_learner_forward.1} parent=0 // pred_region
    _
  $region17: #{base_learner_forward.1} parent=0 // pred_fallthru
    _
  // Predicated region
  $region18: #{base_learner_forward.1} parent=0 // pred_check
    _
  $region19: #{base_learner_forward.1} parent=0 // pred_check_branch
    %19 = sbr.rel (0) target = $region21
  $region20: #{base_learner_forward.1} parent=0 // pred_region
    _
  $region21: #{base_learner_forward.1} parent=0 // pred_fallthru
    _
  %v20 = vld [vmem:[%s0] sm:$0xf]
  %v21 = vld [vmem:[%s0 + $0x4] sm:$0xf]
  %v22 = vld [vmem:[%s0 + $0x8] sm:$0xf]
  %v23 = vld [vmem:[%s0 + $0xc] sm:$0xf]
  %v24 = vld [vmem:[%s0 + $0x10] sm:$0xf]
  %v25 = vld [vmem:[%s0 + $0x14] sm:$0xf]
  %v26 = vld [vmem:[%s0 + $0x18] sm:$0xf]
  %v27 = vld [vmem:[%s0 + $0x1c] sm:$0xf]
  %v28 = vld [vmem:[%s0 + $0x20] sm:$0xf]
  %v29 = vld [vmem:[%s0 + $0x24] sm:$0xf]
  %v30 = vld [vmem:[%s0 + $0x28] sm:$0xf]
  %v31 = vld [vmem:[%s0 + $0x2c] sm:$0xf]
  %v32 = vld [vmem:[%s0 + $0x30] sm:$0xf]
  %v33 = vld [vmem:[%s0 + $0x34] sm:$0xf]
  %v34 = vld [vmem:[%s0 + $0x38] sm:$0xf]
  %v35 = vld [vmem:[%s0 + $0x3c] sm:$0xf]
  %v36 = vld [vmem:[%s0 + $0x40] sm:$0xf]
  %v37 = vld [vmem:[%s0 + $0x44] sm:$0xf]
  %v38 = vld [vmem:[%s0 + $0x48] sm:$0xf]
  %v39 = vld [vmem:[%s0 + $0x4c] sm:$0xf]
  %v40 = vld [vmem:[%s0 + $0x50] sm:$0xf]
  %v41 = vld [vmem:[%s0 + $0x54] sm:$0xf]
  %v42 = vld [vmem:[%s0 + $0x58] sm:$0xf]
  %v43 = vld [vmem:[%s0 + $0x5c] sm:$0xf]
  %v44 = vld [vmem:[%s0 + $0x60] sm:$0xf]
  %v45 = vld [vmem:[%s0 + $0x64] sm:$0xf]
  %v46 = vld [vmem:[%s0 + $0x68] sm:$0xf]
  %v47 = vld [vmem:[%s0 + $0x6c] sm:$0xf]
  %v48 = vld [vmem:[%s0 + $0x70] sm:$0xf]
  %v49 = vld [vmem:[%s0 + $0x74] sm:$0xf]
  %v50 = vld [vmem:[%s0 + $0x78] sm:$0xf]
  %v51 = vld [vmem:[%s0 + $0x7c] sm:$0xf]
  %v52 = vld [vmem:[%s0 + $0x80] sm:$0xf]
  %v53 = vld [vmem:[%s0 + $0x84] sm:$0xf]
  %v54 = vld [vmem:[%s0 + $0x88] sm:$0xf]
  %v55 = vld [vmem:[%s0 + $0x8c] sm:$0xf]
  %v56 = vld [vmem:[%s0 + $0x90] sm:$0xf]
  %v57 = vld [vmem:[%s0 + $0x94] sm:$0xf]
  %v58 = vld [vmem:[%s0 + $0x98] sm:$0xf]
  %v59 = vld [vmem:[%s0 + $0x9c] sm:$0xf]
  %v60 = vld [vmem:[%s0 + $0xa0] sm:$0xf]
  %v61 = vld [vmem:[%s0 + $0xa4] sm:$0xf]
  %v62 = vld [vmem:[%s0 + $0xa8] sm:$0xf]
  %v63 = vld [vmem:[%s0 + $0xac] sm:$0xf]
  %v64 = vld [vmem:[%s0 + $0xb0] sm:$0xf]
  %v65 = vld [vmem:[%s0 + $0xb4] sm:$0xf]
  %v66 = vld [vmem:[%s0 + $0xb8] sm:$0xf]
  %v67 = vld [vmem:[%s0 + $0xbc] sm:$0xf]
  %v68 = vld [vmem:[%s0 + $0xc0] sm:$0xf]
  %v69 = vld [vmem:[%s0 + $0xc4] sm:$0xf]
  %v70 = vld [vmem:[%s0 + $0xc8] sm:$0xf]
  %v71 = vld [vmem:[%s0 + $0xcc] sm:$0xf]
  %v72 = vld [vmem:[%s0 + $0xd0] sm:$0xf]
  %v73 = vld [vmem:[%s0 + $0xd4] sm:$0xf]
  %v74 = vld [vmem:[%s0 + $0xd8] sm:$0xf]
  %v75 = vld [vmem:[%s0 + $0xdc] sm:$0xf]
  %v76 = vld [vmem:[%s0 + $0xe0] sm:$0xf]
  %v77 = vld [vmem:[%s0 + $0xe4] sm:$0xf]
  %v78 = vld [vmem:[%s0 + $0xe8] sm:$0xf]
  %v79 = vld [vmem:[%s0 + $0xec] sm:$0xf]
  %v80 = vld [vmem:[%s0 + $0xf0] sm:$0xf]
  %v81 = vld [vmem:[%s0 + $0xf4] sm:$0xf]
  %v82 = vld [vmem:[%s0 + $0xf8] sm:$0xf]
  %v83 = vld [vmem:[%s0 + $0xfc] sm:$0xf]
  %v84 = vld [vmem:[%s0 + $0x100] sm:$0xf]
  %v85 = vld [vmem:[%s0 + $0x104] sm:$0xf]
  %v86 = vld [vmem:[%s0 + $0x108] sm:$0xf]
  %v87 = vld [vmem:[%s0 + $0x10c] sm:$0xf]
  %v88 = vld [vmem:[%s0 + $0x110] sm:$0xf]
  %v89 = vld [vmem:[%s0 + $0x114] sm:$0xf]
  %v90 = vld [vmem:[%s0 + $0x118] sm:$0xf]
  %v91 = vld [vmem:[%s0 + $0x11c] sm:$0xf]
  %v92 = vld [vmem:[%s0 + $0x120] sm:$0xf]
  %v93 = vld [vmem:[%s0 + $0x124] sm:$0xf]
  %v94 = vld [vmem:[%s0 + $0x128] sm:$0xf]
  %v95 = vld [vmem:[%s0 + $0x12c] sm:$0xf]
  %v96 = vld [vmem:[%s0 + $0x130] sm:$0xf]
  %v97 = vld [vmem:[%s0 + $0x134] sm:$0xf]
  %v98 = vld [vmem:[%s0 + $0x138] sm:$0xf]
  %v99 = vld [vmem:[%s0 + $0x13c] sm:$0xf]
  %v100 = vld [vmem:[%s0 + $0x140] sm:$0xf]
  %v101 = vld [vmem:[%s0 + $0x144] sm:$0xf]
  %v102 = vld [vmem:[%s0 + $0x148] sm:$0xf]
  %v103 = vld [vmem:[%s0 + $0x14c] sm:$0xf]
  %v104 = vld [vmem:[%s0 + $0x150] sm:$0xf]
  %v105 = vld [vmem:[%s0 + $0x154] sm:$0xf]
  %v106 = vld [vmem:[%s0 + $0x158] sm:$0xf]
  %v107 = vld [vmem:[%s0 + $0x15c] sm:$0xf]
  %v108 = vld [vmem:[%s0 + $0x160] sm:$0xf]
  %v109 = vld [vmem:[%s0 + $0x164] sm:$0xf]
  %v110 = vld [vmem:[%s0 + $0x168] sm:$0xf]
  %v111 = vld [vmem:[%s0 + $0x16c] sm:$0xf]
  %v112 = vld [vmem:[%s0 + $0x170] sm:$0xf]
  %v113 = vld [vmem:[%s0 + $0x174] sm:$0xf]
  %v114 = vld [vmem:[%s0 + $0x178] sm:$0xf]
  %v115 = vld [vmem:[%s0 + $0x17c] sm:$0xf]
  %v116 = vld [vmem:[%s0 + $0x180] sm:$0xf]
  %v117 = vld [vmem:[%s0 + $0x184] sm:$0xf]
  %v118 = vld [vmem:[%s0 + $0x188] sm:$0xf]
  %v119 = vld [vmem:[%s0 + $0x18c] sm:$0xf]
  %v120 = vld [vmem:[%s0 + $0x190] sm:$0xf]
  %v121 = vld [vmem:[%s0 + $0x194] sm:$0xf]
  %v122 = vld [vmem:[%s0 + $0x198] sm:$0xf]
  %v123 = vld [vmem:[%s0 + $0x19c] sm:$0xf]
  %v124 = vld [vmem:[%s0 + $0x1a0] sm:$0xf]
  %v125 = vld [vmem:[%s0 + $0x1a4] sm:$0xf]
  %v126 = vld [vmem:[%s0 + $0x1a8] sm:$0xf]
  %v127 = vld [vmem:[%s0 + $0x1ac] sm:$0xf]
  %v128 = vld [vmem:[%s0 + $0x1b0] sm:$0xf]
  %v129 = vld [vmem:[%s0 + $0x1b4] sm:$0xf]
  %v130 = vld [vmem:[%s0 + $0x1b8] sm:$0xf]
  %v131 = vld [vmem:[%s0 + $0x1bc] sm:$0xf]
  %v132 = vld [vmem:[%s0 + $0x1c0] sm:$0xf]
  %v133 = vld [vmem:[%s0 + $0x1c4] sm:$0xf]
  %v134 = vld [vmem:[%s0 + $0x1c8] sm:$0xf]
  %v135 = vld [vmem:[%s0 + $0x1cc] sm:$0xf]
  %v136 = vld [vmem:[%s0 + $0x1d0] sm:$0xf]
  %v137 = vld [vmem:[%s0 + $0x1d4] sm:$0xf]
  %v138 = vld [vmem:[%s0 + $0x1d8] sm:$0xf]
  %v139 = vld [vmem:[%s0 + $0x1dc] sm:$0xf]
  %v140 = vld [vmem:[%s0 + $0x1e0] sm:$0xf]
  %v141 = vld [vmem:[%s0 + $0x1e4] sm:$0xf]
  %v142 = vld [vmem:[%s0 + $0x1e8] sm:$0xf]
  %v143 = vld [vmem:[%s0 + $0x1ec] sm:$0xf]
  %v144 = vld [vmem:[%s0 + $0x1f0] sm:$0xf]
  %v145 = vld [vmem:[%s0 + $0x1f4] sm:$0xf]
  %v146 = vld [vmem:[%s0 + $0x1f8] sm:$0xf]
  %v147 = vld [vmem:[%s0 + $0x1fc] sm:$0xf]
  %v148 = vld [vmem:[%s1] sm:$0xf]
  %v149 = vld [vmem:[%s1 + $0x4] sm:$0xf]
  %v150 = vld [vmem:[%s1 + $0x8] sm:$0xf]
  %v151 = vld [vmem:[%s1 + $0xc] sm:$0xf]
  %v152 = vld [vmem:[%s1 + $0x10] sm:$0xf]
  %v153 = vld [vmem:[%s1 + $0x14] sm:$0xf]
  %v154 = vld [vmem:[%s1 + $0x18] sm:$0xf]
  %v155 = vld [vmem:[%s1 + $0x1c] sm:$0xf]
  %v156 = vld [vmem:[%s1 + $0x20] sm:$0xf]
  %v157 = vld [vmem:[%s1 + $0x24] sm:$0xf]
  %v158 = vld [vmem:[%s1 + $0x28] sm:$0xf]
  %v159 = vld [vmem:[%s1 + $0x2c] sm:$0xf]
  %v160 = vld [vmem:[%s1 + $0x30] sm:$0xf]
  %v161 = vld [vmem:[%s1 + $0x34] sm:$0xf]
  %v162 = vld [vmem:[%s1 + $0x38] sm:$0xf]
  %v163 = vld [vmem:[%s1 + $0x3c] sm:$0xf]
  %v164 = vld [vmem:[%s2] sm:$0x7]
  %v293 = vunpack.c.l.b16 %v20
  %v294 = vunpack.c.l.b16 %v21
  %v295 = vunpack.c.l.b16 %v22
  %v296 = vunpack.c.l.b16 %v23
  %v297 = vunpack.c.l.b16 %v24
  %v298 = vunpack.c.l.b16 %v25
  %v299 = vunpack.c.l.b16 %v26
  %v300 = vunpack.c.l.b16 %v27
  %v301 = vunpack.c.l.b16 %v28
  %v302 = vunpack.c.l.b16 %v29
  %v303 = vunpack.c.l.b16 %v30
  %v304 = vunpack.c.l.b16 %v31
  %v305 = vunpack.c.l.b16 %v32
  %v306 = vunpack.c.l.b16 %v33
  %v307 = vunpack.c.l.b16 %v34
  %v308 = vunpack.c.l.b16 %v35
  %v309 = vunpack.c.l.b16 %v36
  %v310 = vunpack.c.l.b16 %v37
  %v311 = vunpack.c.l.b16 %v38
  %v312 = vunpack.c.l.b16 %v39
  %v313 = vunpack.c.l.b16 %v40
  %v314 = vunpack.c.l.b16 %v41
  %v315 = vunpack.c.l.b16 %v42
  %v316 = vunpack.c.l.b16 %v43
  %v317 = vunpack.c.l.b16 %v44
  %v318 = vunpack.c.l.b16 %v45
  %v319 = vunpack.c.l.b16 %v46
  %v320 = vunpack.c.l.b16 %v47
  %v321 = vunpack.c.l.b16 %v48
  %v322 = vunpack.c.l.b16 %v49
  %v323 = vunpack.c.l.b16 %v50
  %v324 = vunpack.c.l.b16 %v51
  %v325 = vunpack.c.l.b16 %v52
  %v326 = vunpack.c.l.b16 %v53
  %v327 = vunpack.c.l.b16 %v54
  %v328 = vunpack.c.l.b16 %v55
  %v329 = vunpack.c.l.b16 %v56
  %v330 = vunpack.c.l.b16 %v57
  %v331 = vunpack.c.l.b16 %v58
  %v332 = vunpack.c.l.b16 %v59
  %v333 = vunpack.c.l.b16 %v60
  %v334 = vunpack.c.l.b16 %v61
  %v335 = vunpack.c.l.b16 %v62
  %v336 = vunpack.c.l.b16 %v63
  %v337 = vunpack.c.l.b16 %v64
  %v338 = vunpack.c.l.b16 %v65
  %v339 = vunpack.c.l.b16 %v66
  %v340 = vunpack.c.l.b16 %v67
  %v341 = vunpack.c.l.b16 %v68
  %v342 = vunpack.c.l.b16 %v69
  %v343 = vunpack.c.l.b16 %v70
  %v344 = vunpack.c.l.b16 %v71
  %v345 = vunpack.c.l.b16 %v72
  %v346 = vunpack.c.l.b16 %v73
  %v347 = vunpack.c.l.b16 %v74
  %v348 = vunpack.c.l.b16 %v75
  %v349 = vunpack.c.l.b16 %v76
  %v350 = vunpack.c.l.b16 %v77
  %v351 = vunpack.c.l.b16 %v78
  %v352 = vunpack.c.l.b16 %v79
  %v353 = vunpack.c.l.b16 %v80
  %v354 = vunpack.c.l.b16 %v81
  %v355 = vunpack.c.l.b16 %v82
  %v356 = vunpack.c.l.b16 %v83
  %v357 = vunpack.c.l.b16 %v84
  %v358 = vunpack.c.l.b16 %v85
  %v359 = vunpack.c.l.b16 %v86
  %v360 = vunpack.c.l.b16 %v87
  %v361 = vunpack.c.l.b16 %v88
  %v362 = vunpack.c.l.b16 %v89
  %v363 = vunpack.c.l.b16 %v90
  %v364 = vunpack.c.l.b16 %v91
  %v365 = vunpack.c.l.b16 %v92
  %v366 = vunpack.c.l.b16 %v93
  %v367 = vunpack.c.l.b16 %v94
  %v368 = vunpack.c.l.b16 %v95
  %v369 = vunpack.c.l.b16 %v96
  %v370 = vunpack.c.l.b16 %v97
  %v371 = vunpack.c.l.b16 %v98
  %v372 = vunpack.c.l.b16 %v99
  %v373 = vunpack.c.l.b16 %v100
  %v374 = vunpack.c.l.b16 %v101
  %v375 = vunpack.c.l.b16 %v102
  %v376 = vunpack.c.l.b16 %v103
  %v377 = vunpack.c.l.b16 %v104
  %v378 = vunpack.c.l.b16 %v105
  %v379 = vunpack.c.l.b16 %v106
  %v380 = vunpack.c.l.b16 %v107
  %v381 = vunpack.c.l.b16 %v108
  %v382 = vunpack.c.l.b16 %v109
  %v383 = vunpack.c.l.b16 %v110
  %v384 = vunpack.c.l.b16 %v111
  %v385 = vunpack.c.l.b16 %v112
  %v386 = vunpack.c.l.b16 %v113
  %v387 = vunpack.c.l.b16 %v114
  %v388 = vunpack.c.l.b16 %v115
  %v389 = vunpack.c.l.b16 %v116
  %v390 = vunpack.c.l.b16 %v117
  %v391 = vunpack.c.l.b16 %v118
  %v392 = vunpack.c.l.b16 %v119
  %v393 = vunpack.c.l.b16 %v120
  %v394 = vunpack.c.l.b16 %v121
  %v395 = vunpack.c.l.b16 %v122
  %v396 = vunpack.c.l.b16 %v123
  %v397 = vunpack.c.l.b16 %v124
  %v398 = vunpack.c.l.b16 %v125
  %v399 = vunpack.c.l.b16 %v126
  %v400 = vunpack.c.l.b16 %v127
  %v401 = vunpack.c.l.b16 %v128
  %v402 = vunpack.c.l.b16 %v129
  %v403 = vunpack.c.l.b16 %v130
  %v404 = vunpack.c.l.b16 %v131
  %v405 = vunpack.c.l.b16 %v132
  %v406 = vunpack.c.l.b16 %v133
  %v407 = vunpack.c.l.b16 %v134
  %v408 = vunpack.c.l.b16 %v135
  %v409 = vunpack.c.l.b16 %v136
  %v410 = vunpack.c.l.b16 %v137
  %v411 = vunpack.c.l.b16 %v138
  %v412 = vunpack.c.l.b16 %v139
  %v413 = vunpack.c.l.b16 %v140
  %v414 = vunpack.c.l.b16 %v141
  %v415 = vunpack.c.l.b16 %v142
  %v416 = vunpack.c.l.b16 %v143
  %v417 = vunpack.c.l.b16 %v144
  %v418 = vunpack.c.l.b16 %v145
  %v419 = vunpack.c.l.b16 %v146
  %v420 = vunpack.c.l.b16 %v147
  %v421 = vpack.c.b16 %v294, %v293
  %v422 = vpack.c.b16 %v296, %v295
  %v423 = vpack.c.b16 %v298, %v297
  %v424 = vpack.c.b16 %v300, %v299
  %v425 = vpack.c.b16 %v302, %v301
  %v426 = vpack.c.b16 %v304, %v303
  %v427 = vpack.c.b16 %v306, %v305
  %v428 = vpack.c.b16 %v308, %v307
  %v429 = vpack.c.b16 %v310, %v309
  %v430 = vpack.c.b16 %v312, %v311
  %v431 = vpack.c.b16 %v314, %v313
  %v432 = vpack.c.b16 %v316, %v315
  %v433 = vpack.c.b16 %v318, %v317
  %v434 = vpack.c.b16 %v320, %v319
  %v435 = vpack.c.b16 %v322, %v321
  %v436 = vpack.c.b16 %v324, %v323
  %v437 = vpack.c.b16 %v326, %v325
  %v438 = vpack.c.b16 %v328, %v327
  %v439 = vpack.c.b16 %v330, %v329
  %v440 = vpack.c.b16 %v332, %v331
  %v441 = vpack.c.b16 %v334, %v333
  %v442 = vpack.c.b16 %v336, %v335
  %v443 = vpack.c.b16 %v338, %v337
  %v444 = vpack.c.b16 %v340, %v339
  %v445 = vpack.c.b16 %v342, %v341
  %v446 = vpack.c.b16 %v344, %v343
  %v447 = vpack.c.b16 %v346, %v345
  %v448 = vpack.c.b16 %v348, %v347
  %v449 = vpack.c.b16 %v350, %v349
  %v450 = vpack.c.b16 %v352, %v351
  %v451 = vpack.c.b16 %v354, %v353
  %v452 = vpack.c.b16 %v356, %v355
  %v453 = vpack.c.b16 %v358, %v357
  %v454 = vpack.c.b16 %v360, %v359
  %v455 = vpack.c.b16 %v362, %v361
  %v456 = vpack.c.b16 %v364, %v363
  %v457 = vpack.c.b16 %v366, %v365
  %v458 = vpack.c.b16 %v368, %v367
  %v459 = vpack.c.b16 %v370, %v369
  %v460 = vpack.c.b16 %v372, %v371
  %v461 = vpack.c.b16 %v374, %v373
  %v462 = vpack.c.b16 %v376, %v375
  %v463 = vpack.c.b16 %v378, %v377
  %v464 = vpack.c.b16 %v380, %v379
  %v465 = vpack.c.b16 %v382, %v381
  %v466 = vpack.c.b16 %v384, %v383
  %v467 = vpack.c.b16 %v386, %v385
  %v468 = vpack.c.b16 %v388, %v387
  %v469 = vpack.c.b16 %v390, %v389
  %v470 = vpack.c.b16 %v392, %v391
  %v471 = vpack.c.b16 %v394, %v393
  %v472 = vpack.c.b16 %v396, %v395
  %v473 = vpack.c.b16 %v398, %v397
  %v474 = vpack.c.b16 %v400, %v399
  %v475 = vpack.c.b16 %v402, %v401
  %v476 = vpack.c.b16 %v404, %v403
  %v477 = vpack.c.b16 %v406, %v405
  %v478 = vpack.c.b16 %v408, %v407
  %v479 = vpack.c.b16 %v410, %v409
  %v480 = vpack.c.b16 %v412, %v411
  %v481 = vpack.c.b16 %v414, %v413
  %v482 = vpack.c.b16 %v416, %v415
  %v483 = vpack.c.b16 %v418, %v417
  %v484 = vpack.c.b16 %v420, %v419
  %v565 = vunpack.c.l.b16 %v148
  %v566 = vunpack.c.l.b16 %v149
  %v567 = vunpack.c.l.b16 %v150
  %v568 = vunpack.c.l.b16 %v151
  %v569 = vunpack.c.l.b16 %v152
  %v570 = vunpack.c.l.b16 %v153
  %v571 = vunpack.c.l.b16 %v154
  %v572 = vunpack.c.l.b16 %v155
  %v573 = vunpack.c.l.b16 %v156
  %v574 = vunpack.c.l.b16 %v157
  %v575 = vunpack.c.l.b16 %v158
  %v576 = vunpack.c.l.b16 %v159
  %v577 = vunpack.c.l.b16 %v160
  %v578 = vunpack.c.l.b16 %v161
  %v579 = vunpack.c.l.b16 %v162
  %v580 = vunpack.c.l.b16 %v163
  %v581 = vpack.c.b16 %v566, %v565
  %v582 = vpack.c.b16 %v568, %v567
  %v583 = vpack.c.b16 %v570, %v569
  %v584 = vpack.c.b16 %v572, %v571
  %v585 = vpack.c.b16 %v574, %v573
  %v586 = vpack.c.b16 %v576, %v575
  %v587 = vpack.c.b16 %v578, %v577
  %v588 = vpack.c.b16 %v580, %v579
  %597 = vmatpush.bf16.msra.mxu0 %v588
  %598 = vmatpush.bf16.msra.mxu0 %v587
  %599 = vmatpush.bf16.msra.mxu0 %v586
  %600 = vmatpush.bf16.msra.mxu0 %v585
  %601 = vmatpush.bf16.msra.mxu0 %v584
  %602 = vmatpush.bf16.msra.mxu0 %v583
  %603 = vmatpush.bf16.msra.mxu0 %v582
  %604 = vmatpush.bf16.msra.mxu0 %v581
  %605 = vmatmul.bf16.gmra.mxu0 %v421
  %v606 = vpop.f32.mrf.mxu0
  %v607 = vadd.f32 0.0, %v606
  %v608 = vpop.f32.mrf.mxu0
  %v609 = vadd.f32 0.0, %v608
  %610 = vmatmul.bf16.gmra.mxu0 %v422
  %v611 = vpop.f32.mrf.mxu0
  %v612 = vadd.f32 0.0, %v611
  %v613 = vpop.f32.mrf.mxu0
  %v614 = vadd.f32 0.0, %v613
  %615 = vmatmul.bf16.gmra.mxu0 %v423
  %v616 = vpop.f32.mrf.mxu0
  %v617 = vadd.f32 0.0, %v616
  %v618 = vpop.f32.mrf.mxu0
  %v619 = vadd.f32 0.0, %v618
  %620 = vmatmul.bf16.gmra.mxu0 %v424
  %v621 = vpop.f32.mrf.mxu0
  %v622 = vadd.f32 0.0, %v621
  %v623 = vpop.f32.mrf.mxu0
  %v624 = vadd.f32 0.0, %v623
  %625 = vmatmul.bf16.gmra.mxu0 %v425
  %v626 = vpop.f32.mrf.mxu0
  %v627 = vadd.f32 0.0, %v626
  %v628 = vpop.f32.mrf.mxu0
  %v629 = vadd.f32 0.0, %v628
  %630 = vmatmul.bf16.gmra.mxu0 %v426
  %v631 = vpop.f32.mrf.mxu0
  %v632 = vadd.f32 0.0, %v631
  %v633 = vpop.f32.mrf.mxu0
  %v634 = vadd.f32 0.0, %v633
  %635 = vmatmul.bf16.gmra.mxu0 %v427
  %v636 = vpop.f32.mrf.mxu0
  %v637 = vadd.f32 0.0, %v636
  %v638 = vpop.f32.mrf.mxu0
  %v639 = vadd.f32 0.0, %v638
  %640 = vmatmul.bf16.gmra.mxu0 %v428
  %v641 = vpop.f32.mrf.mxu0
  %v642 = vadd.f32 0.0, %v641
  %v643 = vpop.f32.mrf.mxu0
  %v644 = vadd.f32 0.0, %v643
  %645 = vmatmul.bf16.gmra.mxu0 %v429
  %v646 = vpop.f32.mrf.mxu0
  %v647 = vadd.f32 0.0, %v646
  %v648 = vpop.f32.mrf.mxu0
  %v649 = vadd.f32 0.0, %v648
  %650 = vmatmul.bf16.gmra.mxu0 %v430
  %v651 = vpop.f32.mrf.mxu0
  %v652 = vadd.f32 0.0, %v651
  %v653 = vpop.f32.mrf.mxu0
  %v654 = vadd.f32 0.0, %v653
  %655 = vmatmul.bf16.gmra.mxu0 %v431
  %v656 = vpop.f32.mrf.mxu0
  %v657 = vadd.f32 0.0, %v656
  %v658 = vpop.f32.mrf.mxu0
  %v659 = vadd.f32 0.0, %v658
  %660 = vmatmul.bf16.gmra.mxu0 %v432
  %v661 = vpop.f32.mrf.mxu0
  %v662 = vadd.f32 0.0, %v661
  %v663 = vpop.f32.mrf.mxu0
  %v664 = vadd.f32 0.0, %v663
  %665 = vmatmul.bf16.gmra.mxu0 %v433
  %v666 = vpop.f32.mrf.mxu0
  %v667 = vadd.f32 0.0, %v666
  %v668 = vpop.f32.mrf.mxu0
  %v669 = vadd.f32 0.0, %v668
  %670 = vmatmul.bf16.gmra.mxu0 %v434
  %v671 = vpop.f32.mrf.mxu0
  %v672 = vadd.f32 0.0, %v671
  %v673 = vpop.f32.mrf.mxu0
  %v674 = vadd.f32 0.0, %v673
  %675 = vmatmul.bf16.gmra.mxu0 %v435
  %v676 = vpop.f32.mrf.mxu0
  %v677 = vadd.f32 0.0, %v676
  %v678 = vpop.f32.mrf.mxu0
  %v679 = vadd.f32 0.0, %v678
  %680 = vmatmul.bf16.gmra.mxu0 %v436
  %v681 = vpop.f32.mrf.mxu0
  %v682 = vadd.f32 0.0, %v681
  %v683 = vpop.f32.mrf.mxu0
  %v684 = vadd.f32 0.0, %v683
  %685 = vmatmul.bf16.gmra.mxu0 %v437
  %v686 = vpop.f32.mrf.mxu0
  %v687 = vadd.f32 0.0, %v686
  %v688 = vpop.f32.mrf.mxu0
  %v689 = vadd.f32 0.0, %v688
  %690 = vmatmul.bf16.gmra.mxu0 %v438
  %v691 = vpop.f32.mrf.mxu0
  %v692 = vadd.f32 0.0, %v691
  %v693 = vpop.f32.mrf.mxu0
  %v694 = vadd.f32 0.0, %v693
  %695 = vmatmul.bf16.gmra.mxu0 %v439
  %v696 = vpop.f32.mrf.mxu0
  %v697 = vadd.f32 0.0, %v696
  %v698 = vpop.f32.mrf.mxu0
  %v699 = vadd.f32 0.0, %v698
  %700 = vmatmul.bf16.gmra.mxu0 %v440
  %v701 = vpop.f32.mrf.mxu0
  %v702 = vadd.f32 0.0, %v701
  %v703 = vpop.f32.mrf.mxu0
  %v704 = vadd.f32 0.0, %v703
  %705 = vmatmul.bf16.gmra.mxu0 %v441
  %v706 = vpop.f32.mrf.mxu0
  %v707 = vadd.f32 0.0, %v706
  %v708 = vpop.f32.mrf.mxu0
  %v709 = vadd.f32 0.0, %v708
  %710 = vmatmul.bf16.gmra.mxu0 %v442
  %v711 = vpop.f32.mrf.mxu0
  %v712 = vadd.f32 0.0, %v711
  %v713 = vpop.f32.mrf.mxu0
  %v714 = vadd.f32 0.0, %v713
  %715 = vmatmul.bf16.gmra.mxu0 %v443
  %v716 = vpop.f32.mrf.mxu0
  %v717 = vadd.f32 0.0, %v716
  %v718 = vpop.f32.mrf.mxu0
  %v719 = vadd.f32 0.0, %v718
  %720 = vmatmul.bf16.gmra.mxu0 %v444
  %v721 = vpop.f32.mrf.mxu0
  %v722 = vadd.f32 0.0, %v721
  %v723 = vpop.f32.mrf.mxu0
  %v724 = vadd.f32 0.0, %v723
  %725 = vmatmul.bf16.gmra.mxu0 %v445
  %v726 = vpop.f32.mrf.mxu0
  %v727 = vadd.f32 0.0, %v726
  %v728 = vpop.f32.mrf.mxu0
  %v729 = vadd.f32 0.0, %v728
  %730 = vmatmul.bf16.gmra.mxu0 %v446
  %v731 = vpop.f32.mrf.mxu0
  %v732 = vadd.f32 0.0, %v731
  %v733 = vpop.f32.mrf.mxu0
  %v734 = vadd.f32 0.0, %v733
  %735 = vmatmul.bf16.gmra.mxu0 %v447
  %v736 = vpop.f32.mrf.mxu0
  %v737 = vadd.f32 0.0, %v736
  %v738 = vpop.f32.mrf.mxu0
  %v739 = vadd.f32 0.0, %v738
  %740 = vmatmul.bf16.gmra.mxu0 %v448
  %v741 = vpop.f32.mrf.mxu0
  %v742 = vadd.f32 0.0, %v741
  %v743 = vpop.f32.mrf.mxu0
  %v744 = vadd.f32 0.0, %v743
  %745 = vmatmul.bf16.gmra.mxu0 %v449
  %v746 = vpop.f32.mrf.mxu0
  %v747 = vadd.f32 0.0, %v746
  %v748 = vpop.f32.mrf.mxu0
  %v749 = vadd.f32 0.0, %v748
  %750 = vmatmul.bf16.gmra.mxu0 %v450
  %v751 = vpop.f32.mrf.mxu0
  %v752 = vadd.f32 0.0, %v751
  %v753 = vpop.f32.mrf.mxu0
  %v754 = vadd.f32 0.0, %v753
  %755 = vmatmul.bf16.gmra.mxu0 %v451
  %v756 = vpop.f32.mrf.mxu0
  %v757 = vadd.f32 0.0, %v756
  %v758 = vpop.f32.mrf.mxu0
  %v759 = vadd.f32 0.0, %v758
  %760 = vmatmul.bf16.gmra.mxu0 %v452
  %v761 = vpop.f32.mrf.mxu0
  %v762 = vadd.f32 0.0, %v761
  %v763 = vpop.f32.mrf.mxu0
  %v764 = vadd.f32 0.0, %v763
  %765 = vmatmul.bf16.gmra.mxu0 %v453
  %v766 = vpop.f32.mrf.mxu0
  %v767 = vadd.f32 0.0, %v766
  %v768 = vpop.f32.mrf.mxu0
  %v769 = vadd.f32 0.0, %v768
  %770 = vmatmul.bf16.gmra.mxu0 %v454
  %v771 = vpop.f32.mrf.mxu0
  %v772 = vadd.f32 0.0, %v771
  %v773 = vpop.f32.mrf.mxu0
  %v774 = vadd.f32 0.0, %v773
  %775 = vmatmul.bf16.gmra.mxu0 %v455
  %v776 = vpop.f32.mrf.mxu0
  %v777 = vadd.f32 0.0, %v776
  %v778 = vpop.f32.mrf.mxu0
  %v779 = vadd.f32 0.0, %v778
  %780 = vmatmul.bf16.gmra.mxu0 %v456
  %v781 = vpop.f32.mrf.mxu0
  %v782 = vadd.f32 0.0, %v781
  %v783 = vpop.f32.mrf.mxu0
  %v784 = vadd.f32 0.0, %v783
  %785 = vmatmul.bf16.gmra.mxu0 %v457
  %v786 = vpop.f32.mrf.mxu0
  %v787 = vadd.f32 0.0, %v786
  %v788 = vpop.f32.mrf.mxu0
  %v789 = vadd.f32 0.0, %v788
  %790 = vmatmul.bf16.gmra.mxu0 %v458
  %v791 = vpop.f32.mrf.mxu0
  %v792 = vadd.f32 0.0, %v791
  %v793 = vpop.f32.mrf.mxu0
  %v794 = vadd.f32 0.0, %v793
  %795 = vmatmul.bf16.gmra.mxu0 %v459
  %v796 = vpop.f32.mrf.mxu0
  %v797 = vadd.f32 0.0, %v796
  %v798 = vpop.f32.mrf.mxu0
  %v799 = vadd.f32 0.0, %v798
  %800 = vmatmul.bf16.gmra.mxu0 %v460
  %v801 = vpop.f32.mrf.mxu0
  %v802 = vadd.f32 0.0, %v801
  %v803 = vpop.f32.mrf.mxu0
  %v804 = vadd.f32 0.0, %v803
  %805 = vmatmul.bf16.gmra.mxu0 %v461
  %v806 = vpop.f32.mrf.mxu0
  %v807 = vadd.f32 0.0, %v806
  %v808 = vpop.f32.mrf.mxu0
  %v809 = vadd.f32 0.0, %v808
  %810 = vmatmul.bf16.gmra.mxu0 %v462
  %v811 = vpop.f32.mrf.mxu0
  %v812 = vadd.f32 0.0, %v811
  %v813 = vpop.f32.mrf.mxu0
  %v814 = vadd.f32 0.0, %v813
  %815 = vmatmul.bf16.gmra.mxu0 %v463
  %v816 = vpop.f32.mrf.mxu0
  %v817 = vadd.f32 0.0, %v816
  %v818 = vpop.f32.mrf.mxu0
  %v819 = vadd.f32 0.0, %v818
  %820 = vmatmul.bf16.gmra.mxu0 %v464
  %v821 = vpop.f32.mrf.mxu0
  %v822 = vadd.f32 0.0, %v821
  %v823 = vpop.f32.mrf.mxu0
  %v824 = vadd.f32 0.0, %v823
  %825 = vmatmul.bf16.gmra.mxu0 %v465
  %v826 = vpop.f32.mrf.mxu0
  %v827 = vadd.f32 0.0, %v826
  %v828 = vpop.f32.mrf.mxu0
  %v829 = vadd.f32 0.0, %v828
  %830 = vmatmul.bf16.gmra.mxu0 %v466
  %v831 = vpop.f32.mrf.mxu0
  %v832 = vadd.f32 0.0, %v831
  %v833 = vpop.f32.mrf.mxu0
  %v834 = vadd.f32 0.0, %v833
  %835 = vmatmul.bf16.gmra.mxu0 %v467
  %v836 = vpop.f32.mrf.mxu0
  %v837 = vadd.f32 0.0, %v836
  %v838 = vpop.f32.mrf.mxu0
  %v839 = vadd.f32 0.0, %v838
  %840 = vmatmul.bf16.gmra.mxu0 %v468
  %v841 = vpop.f32.mrf.mxu0
  %v842 = vadd.f32 0.0, %v841
  %v843 = vpop.f32.mrf.mxu0
  %v844 = vadd.f32 0.0, %v843
  %845 = vmatmul.bf16.gmra.mxu0 %v469
  %v846 = vpop.f32.mrf.mxu0
  %v847 = vadd.f32 0.0, %v846
  %v848 = vpop.f32.mrf.mxu0
  %v849 = vadd.f32 0.0, %v848
  %850 = vmatmul.bf16.gmra.mxu0 %v470
  %v851 = vpop.f32.mrf.mxu0
  %v852 = vadd.f32 0.0, %v851
  %v853 = vpop.f32.mrf.mxu0
  %v854 = vadd.f32 0.0, %v853
  %855 = vmatmul.bf16.gmra.mxu0 %v471
  %v856 = vpop.f32.mrf.mxu0
  %v857 = vadd.f32 0.0, %v856
  %v858 = vpop.f32.mrf.mxu0
  %v859 = vadd.f32 0.0, %v858
  %860 = vmatmul.bf16.gmra.mxu0 %v472
  %v861 = vpop.f32.mrf.mxu0
  %v862 = vadd.f32 0.0, %v861
  %v863 = vpop.f32.mrf.mxu0
  %v864 = vadd.f32 0.0, %v863
  %865 = vmatmul.bf16.gmra.mxu0 %v473
  %v866 = vpop.f32.mrf.mxu0
  %v867 = vadd.f32 0.0, %v866
  %v868 = vpop.f32.mrf.mxu0
  %v869 = vadd.f32 0.0, %v868
  %870 = vmatmul.bf16.gmra.mxu0 %v474
  %v871 = vpop.f32.mrf.mxu0
  %v872 = vadd.f32 0.0, %v871
  %v873 = vpop.f32.mrf.mxu0
  %v874 = vadd.f32 0.0, %v873
  %875 = vmatmul.bf16.gmra.mxu0 %v475
  %v876 = vpop.f32.mrf.mxu0
  %v877 = vadd.f32 0.0, %v876
  %v878 = vpop.f32.mrf.mxu0
  %v879 = vadd.f32 0.0, %v878
  %880 = vmatmul.bf16.gmra.mxu0 %v476
  %v881 = vpop.f32.mrf.mxu0
  %v882 = vadd.f32 0.0, %v881
  %v883 = vpop.f32.mrf.mxu0
  %v884 = vadd.f32 0.0, %v883
  %885 = vmatmul.bf16.gmra.mxu0 %v477
  %v886 = vpop.f32.mrf.mxu0
  %v887 = vadd.f32 0.0, %v886
  %v888 = vpop.f32.mrf.mxu0
  %v889 = vadd.f32 0.0, %v888
  %890 = vmatmul.bf16.gmra.mxu0 %v478
  %v891 = vpop.f32.mrf.mxu0
  %v892 = vadd.f32 0.0, %v891
  %v893 = vpop.f32.mrf.mxu0
  %v894 = vadd.f32 0.0, %v893
  %895 = vmatmul.bf16.gmra.mxu0 %v479
  %v896 = vpop.f32.mrf.mxu0
  %v897 = vadd.f32 0.0, %v896
  %v898 = vpop.f32.mrf.mxu0
  %v899 = vadd.f32 0.0, %v898
  %900 = vmatmul.bf16.gmra.mxu0 %v480
  %v901 = vpop.f32.mrf.mxu0
  %v902 = vadd.f32 0.0, %v901
  %v903 = vpop.f32.mrf.mxu0
  %v904 = vadd.f32 0.0, %v903
  %905 = vmatmul.bf16.gmra.mxu0 %v481
  %v906 = vpop.f32.mrf.mxu0
  %v907 = vadd.f32 0.0, %v906
  %v908 = vpop.f32.mrf.mxu0
  %v909 = vadd.f32 0.0, %v908
  %910 = vmatmul.bf16.gmra.mxu0 %v482
  %v911 = vpop.f32.mrf.mxu0
  %v912 = vadd.f32 0.0, %v911
  %v913 = vpop.f32.mrf.mxu0
  %v914 = vadd.f32 0.0, %v913
  %915 = vmatmul.bf16.gmra.mxu0 %v483
  %v916 = vpop.f32.mrf.mxu0
  %v917 = vadd.f32 0.0, %v916
  %v918 = vpop.f32.mrf.mxu0
  %v919 = vadd.f32 0.0, %v918
  %920 = vmatmul.bf16.gmra.mxu0 %v484
  %v921 = vpop.f32.mrf.mxu0
  %v922 = vadd.f32 0.0, %v921
  %v923 = vpop.f32.mrf.mxu0
  %v924 = vadd.f32 0.0, %v923
  %925 = vdwg.mxu0
  %v926 = vadd.f32 %v607, %v609
  %v927 = vadd.f32 %v926, %v612
  %v928 = vadd.f32 %v927, %v614
  %v929 = vadd.f32 %v928, %v617
  %v930 = vadd.f32 %v929, %v619
  %v931 = vadd.f32 %v930, %v622
  %v932 = vadd.f32 %v931, %v624
  %v933 = vadd.f32 %v932, %v627
  %v934 = vadd.f32 %v933, %v629
  %v935 = vadd.f32 %v934, %v632
  %v936 = vadd.f32 %v935, %v634
  %v937 = vadd.f32 %v936, %v637
  %v938 = vadd.f32 %v937, %v639
  %v939 = vadd.f32 %v938, %v642
  %v940 = vadd.f32 %v939, %v644
  %v941 = vadd.f32 %v940, %v647
  %v942 = vadd.f32 %v941, %v649
  %v943 = vadd.f32 %v942, %v652
  %v944 = vadd.f32 %v943, %v654
  %v945 = vadd.f32 %v944, %v657
  %v946 = vadd.f32 %v945, %v659
  %v947 = vadd.f32 %v946, %v662
  %v948 = vadd.f32 %v947, %v664
  %v949 = vadd.f32 %v948, %v667
  %v950 = vadd.f32 %v949, %v669
  %v951 = vadd.f32 %v950, %v672
  %v952 = vadd.f32 %v951, %v674
  %v953 = vadd.f32 %v952, %v677
  %v954 = vadd.f32 %v953, %v679
  %v955 = vadd.f32 %v954, %v682
  %v956 = vadd.f32 %v955, %v684
  %v957 = vadd.f32 %v956, %v687
  %v958 = vadd.f32 %v957, %v689
  %v959 = vadd.f32 %v958, %v692
  %v960 = vadd.f32 %v959, %v694
  %v961 = vadd.f32 %v960, %v697
  %v962 = vadd.f32 %v961, %v699
  %v963 = vadd.f32 %v962, %v702
  %v964 = vadd.f32 %v963, %v704
  %v965 = vadd.f32 %v964, %v707
  %v966 = vadd.f32 %v965, %v709
  %v967 = vadd.f32 %v966, %v712
  %v968 = vadd.f32 %v967, %v714
  %v969 = vadd.f32 %v968, %v717
  %v970 = vadd.f32 %v969, %v719
  %v971 = vadd.f32 %v970, %v722
  %v972 = vadd.f32 %v971, %v724
  %v973 = vadd.f32 %v972, %v727
  %v974 = vadd.f32 %v973, %v729
  %v975 = vadd.f32 %v974, %v732
  %v976 = vadd.f32 %v975, %v734
  %v977 = vadd.f32 %v976, %v737
  %v978 = vadd.f32 %v977, %v739
  %v979 = vadd.f32 %v978, %v742
  %v980 = vadd.f32 %v979, %v744
  %v981 = vadd.f32 %v980, %v747
  %v982 = vadd.f32 %v981, %v749
  %v983 = vadd.f32 %v982, %v752
  %v984 = vadd.f32 %v983, %v754
  %v985 = vadd.f32 %v984, %v757
  %v986 = vadd.f32 %v985, %v759
  %v987 = vadd.f32 %v986, %v762
  %v988 = vadd.f32 %v987, %v764
  %v989 = vadd.f32 %v988, %v767
  %v990 = vadd.f32 %v989, %v769
  %v991 = vadd.f32 %v990, %v772
  %v992 = vadd.f32 %v991, %v774
  %v993 = vadd.f32 %v992, %v777
  %v994 = vadd.f32 %v993, %v779
  %v995 = vadd.f32 %v994, %v782
  %v996 = vadd.f32 %v995, %v784
  %v997 = vadd.f32 %v996, %v787
  %v998 = vadd.f32 %v997, %v789
  %v999 = vadd.f32 %v998, %v792
  %v1000 = vadd.f32 %v999, %v794
  %v1001 = vadd.f32 %v1000, %v797
  %v1002 = vadd.f32 %v1001, %v799
  %v1003 = vadd.f32 %v1002, %v802
  %v1004 = vadd.f32 %v1003, %v804
  %v1005 = vadd.f32 %v1004, %v807
  %v1006 = vadd.f32 %v1005, %v809
  %v1007 = vadd.f32 %v1006, %v812
  %v1008 = vadd.f32 %v1007, %v814
  %v1009 = vadd.f32 %v1008, %v817
  %v1010 = vadd.f32 %v1009, %v819
  %v1011 = vadd.f32 %v1010, %v822
  %v1012 = vadd.f32 %v1011, %v824
  %v1013 = vadd.f32 %v1012, %v827
  %v1014 = vadd.f32 %v1013, %v829
  %v1015 = vadd.f32 %v1014, %v832
  %v1016 = vadd.f32 %v1015, %v834
  %v1017 = vadd.f32 %v1016, %v837
  %v1018 = vadd.f32 %v1017, %v839
  %v1019 = vadd.f32 %v1018, %v842
  %v1020 = vadd.f32 %v1019, %v844
  %v1021 = vadd.f32 %v1020, %v847
  %v1022 = vadd.f32 %v1021, %v849
  %v1023 = vadd.f32 %v1022, %v852
  %v1024 = vadd.f32 %v1023, %v854
  %v1025 = vadd.f32 %v1024, %v857
  %v1026 = vadd.f32 %v1025, %v859
  %v1027 = vadd.f32 %v1026, %v862
  %v1028 = vadd.f32 %v1027, %v864
  %v1029 = vadd.f32 %v1028, %v867
  %v1030 = vadd.f32 %v1029, %v869
  %v1031 = vadd.f32 %v1030, %v872
  %v1032 = vadd.f32 %v1031, %v874
  %v1033 = vadd.f32 %v1032, %v877
  %v1034 = vadd.f32 %v1033, %v879
  %v1035 = vadd.f32 %v1034, %v882
  %v1036 = vadd.f32 %v1035, %v884
  %v1037 = vadd.f32 %v1036, %v887
  %v1038 = vadd.f32 %v1037, %v889
  %v1039 = vadd.f32 %v1038, %v892
  %v1040 = vadd.f32 %v1039, %v894
  %v1041 = vadd.f32 %v1040, %v897
  %v1042 = vadd.f32 %v1041, %v899
  %v1043 = vadd.f32 %v1042, %v902
  %v1044 = vadd.f32 %v1043, %v904
  %v1045 = vadd.f32 %v1044, %v907
  %v1046 = vadd.f32 %v1045, %v909
  %v1047 = vadd.f32 %v1046, %v912
  %v1048 = vadd.f32 %v1047, %v914
  %v1049 = vadd.f32 %v1048, %v917
  %v1050 = vadd.f32 %v1049, %v919
  %v1051 = vadd.f32 %v1050, %v922
  %v1052 = vadd.f32 %v1051, %v924
  %v1053 = vrot.slane %v1052, 4
  %v1054 = vadd.f32 %v1052, %v1053
  %v1055 = vrot.slane %v1054, 2
  %v1056 = vadd.f32 %v1054, %v1055
  %v1057 = vrot.slane %v1056, 1
  %v1058 = vadd.f32 %v1056, %v1057
  %v1059 = vmul.f32 %v1058, 0.0009765625
  %v1060 = vmul.f32 %v607, %v607
  %v1061 = vmul.f32 %v609, %v609
  %v1062 = vmul.f32 %v612, %v612
  %v1063 = vmul.f32 %v614, %v614
  %v1064 = vmul.f32 %v617, %v617
  %v1065 = vmul.f32 %v619, %v619
  %v1066 = vmul.f32 %v622, %v622
  %v1067 = vmul.f32 %v624, %v624
  %v1068 = vmul.f32 %v627, %v627
  %v1069 = vmul.f32 %v629, %v629
  %v1070 = vmul.f32 %v632, %v632
  %v1071 = vmul.f32 %v634, %v634
  %v1072 = vmul.f32 %v637, %v637
  %v1073 = vmul.f32 %v639, %v639
  %v1074 = vmul.f32 %v642, %v642
  %v1075 = vmul.f32 %v644, %v644
  %v1076 = vmul.f32 %v647, %v647
  %v1077 = vmul.f32 %v649, %v649
  %v1078 = vmul.f32 %v652, %v652
  %v1079 = vmul.f32 %v654, %v654
  %v1080 = vmul.f32 %v657, %v657
  %v1081 = vmul.f32 %v659, %v659
  %v1082 = vmul.f32 %v662, %v662
  %v1083 = vmul.f32 %v664, %v664
  %v1084 = vmul.f32 %v667, %v667
  %v1085 = vmul.f32 %v669, %v669
  %v1086 = vmul.f32 %v672, %v672
  %v1087 = vmul.f32 %v674, %v674
  %v1088 = vmul.f32 %v677, %v677
  %v1089 = vmul.f32 %v679, %v679
  %v1090 = vmul.f32 %v682, %v682
  %v1091 = vmul.f32 %v684, %v684
  %v1092 = vmul.f32 %v687, %v687
  %v1093 = vmul.f32 %v689, %v689
  %v1094 = vmul.f32 %v692, %v692
  %v1095 = vmul.f32 %v694, %v694
  %v1096 = vmul.f32 %v697, %v697
  %v1097 = vmul.f32 %v699, %v699
  %v1098 = vmul.f32 %v702, %v702
  %v1099 = vmul.f32 %v704, %v704
  %v1100 = vmul.f32 %v707, %v707
  %v1101 = vmul.f32 %v709, %v709
  %v1102 = vmul.f32 %v712, %v712
  %v1103 = vmul.f32 %v714, %v714
  %v1104 = vmul.f32 %v717, %v717
  %v1105 = vmul.f32 %v719, %v719
  %v1106 = vmul.f32 %v722, %v722
  %v1107 = vmul.f32 %v724, %v724
  %v1108 = vmul.f32 %v727, %v727
  %v1109 = vmul.f32 %v729, %v729
  %v1110 = vmul.f32 %v732, %v732
  %v1111 = vmul.f32 %v734, %v734
  %v1112 = vmul.f32 %v737, %v737
  %v1113 = vmul.f32 %v739, %v739
  %v1114 = vmul.f32 %v742, %v742
  %v1115 = vmul.f32 %v744, %v744
  %v1116 = vmul.f32 %v747, %v747
  %v1117 = vmul.f32 %v749, %v749
  %v1118 = vmul.f32 %v752, %v752
  %v1119 = vmul.f32 %v754, %v754
  %v1120 = vmul.f32 %v757, %v757
  %v1121 = vmul.f32 %v759, %v759
  %v1122 = vmul.f32 %v762, %v762
  %v1123 = vmul.f32 %v764, %v764
  %v1124 = vmul.f32 %v767, %v767
  %v1125 = vmul.f32 %v769, %v769
  %v1126 = vmul.f32 %v772, %v772
  %v1127 = vmul.f32 %v774, %v774
  %v1128 = vmul.f32 %v777, %v777
  %v1129 = vmul.f32 %v779, %v779
  %v1130 = vmul.f32 %v782, %v782
  %v1131 = vmul.f32 %v784, %v784
  %v1132 = vmul.f32 %v787, %v787
  %v1133 = vmul.f32 %v789, %v789
  %v1134 = vmul.f32 %v792, %v792
  %v1135 = vmul.f32 %v794, %v794
  %v1136 = vmul.f32 %v797, %v797
  %v1137 = vmul.f32 %v799, %v799
  %v1138 = vmul.f32 %v802, %v802
  %v1139 = vmul.f32 %v804, %v804
  %v1140 = vmul.f32 %v807, %v807
  %v1141 = vmul.f32 %v809, %v809
  %v1142 = vmul.f32 %v812, %v812
  %v1143 = vmul.f32 %v814, %v814
  %v1144 = vmul.f32 %v817, %v817
  %v1145 = vmul.f32 %v819, %v819
  %v1146 = vmul.f32 %v822, %v822
  %v1147 = vmul.f32 %v824, %v824
  %v1148 = vmul.f32 %v827, %v827
  %v1149 = vmul.f32 %v829, %v829
  %v1150 = vmul.f32 %v832, %v832
  %v1151 = vmul.f32 %v834, %v834
  %v1152 = vmul.f32 %v837, %v837
  %v1153 = vmul.f32 %v839, %v839
  %v1154 = vmul.f32 %v842, %v842
  %v1155 = vmul.f32 %v844, %v844
  %v1156 = vmul.f32 %v847, %v847
  %v1157 = vmul.f32 %v849, %v849
  %v1158 = vmul.f32 %v852, %v852
  %v1159 = vmul.f32 %v854, %v854
  %v1160 = vmul.f32 %v857, %v857
  %v1161 = vmul.f32 %v859, %v859
  %v1162 = vmul.f32 %v862, %v862
  %v1163 = vmul.f32 %v864, %v864
  %v1164 = vmul.f32 %v867, %v867
  %v1165 = vmul.f32 %v869, %v869
  %v1166 = vmul.f32 %v872, %v872
  %v1167 = vmul.f32 %v874, %v874
  %v1168 = vmul.f32 %v877, %v877
  %v1169 = vmul.f32 %v879, %v879
  %v1170 = vmul.f32 %v882, %v882
  %v1171 = vmul.f32 %v884, %v884
  %v1172 = vmul.f32 %v887, %v887
  %v1173 = vmul.f32 %v889, %v889
  %v1174 = vmul.f32 %v892, %v892
  %v1175 = vmul.f32 %v894, %v894
  %v1176 = vmul.f32 %v897, %v897
  %v1177 = vmul.f32 %v899, %v899
  %v1178 = vmul.f32 %v902, %v902
  %v1179 = vmul.f32 %v904, %v904
  %v1180 = vmul.f32 %v907, %v907
  %v1181 = vmul.f32 %v909, %v909
  %v1182 = vmul.f32 %v912, %v912
  %v1183 = vmul.f32 %v914, %v914
  %v1184 = vmul.f32 %v917, %v917
  %v1185 = vmul.f32 %v919, %v919
  %v1186 = vmul.f32 %v922, %v922
  %v1187 = vmul.f32 %v924, %v924
  %v1188 = vadd.f32 %v1060, %v1061
  %v1189 = vadd.f32 %v1188, %v1062
  %v1190 = vadd.f32 %v1189, %v1063
  %v1191 = vadd.f32 %v1190, %v1064
  %v1192 = vadd.f32 %v1191, %v1065
  %v1193 = vadd.f32 %v1192, %v1066
  %v1194 = vadd.f32 %v1193, %v1067
  %v1195 = vadd.f32 %v1194, %v1068
  %v1196 = vadd.f32 %v1195, %v1069
  %v1197 = vadd.f32 %v1196, %v1070
  %v1198 = vadd.f32 %v1197, %v1071
  %v1199 = vadd.f32 %v1198, %v1072
  %v1200 = vadd.f32 %v1199, %v1073
  %v1201 = vadd.f32 %v1200, %v1074
  %v1202 = vadd.f32 %v1201, %v1075
  %v1203 = vadd.f32 %v1202, %v1076
  %v1204 = vadd.f32 %v1203, %v1077
  %v1205 = vadd.f32 %v1204, %v1078
  %v1206 = vadd.f32 %v1205, %v1079
  %v1207 = vadd.f32 %v1206, %v1080
  %v1208 = vadd.f32 %v1207, %v1081
  %v1209 = vadd.f32 %v1208, %v1082
  %v1210 = vadd.f32 %v1209, %v1083
  %v1211 = vadd.f32 %v1210, %v1084
  %v1212 = vadd.f32 %v1211, %v1085
  %v1213 = vadd.f32 %v1212, %v1086
  %v1214 = vadd.f32 %v1213, %v1087
  %v1215 = vadd.f32 %v1214, %v1088
  %v1216 = vadd.f32 %v1215, %v1089
  %v1217 = vadd.f32 %v1216, %v1090
  %v1218 = vadd.f32 %v1217, %v1091
  %v1219 = vadd.f32 %v1218, %v1092
  %v1220 = vadd.f32 %v1219, %v1093
  %v1221 = vadd.f32 %v1220, %v1094
  %v1222 = vadd.f32 %v1221, %v1095
  %v1223 = vadd.f32 %v1222, %v1096
  %v1224 = vadd.f32 %v1223, %v1097
  %v1225 = vadd.f32 %v1224, %v1098
  %v1226 = vadd.f32 %v1225, %v1099
  %v1227 = vadd.f32 %v1226, %v1100
  %v1228 = vadd.f32 %v1227, %v1101
  %v1229 = vadd.f32 %v1228, %v1102
  %v1230 = vadd.f32 %v1229, %v1103
  %v1231 = vadd.f32 %v1230, %v1104
  %v1232 = vadd.f32 %v1231, %v1105
  %v1233 = vadd.f32 %v1232, %v1106
  %v1234 = vadd.f32 %v1233, %v1107
  %v1235 = vadd.f32 %v1234, %v1108
  %v1236 = vadd.f32 %v1235, %v1109
  %v1237 = vadd.f32 %v1236, %v1110
  %v1238 = vadd.f32 %v1237, %v1111
  %v1239 = vadd.f32 %v1238, %v1112
  %v1240 = vadd.f32 %v1239, %v1113
  %v1241 = vadd.f32 %v1240, %v1114
  %v1242 = vadd.f32 %v1241, %v1115
  %v1243 = vadd.f32 %v1242, %v1116
  %v1244 = vadd.f32 %v1243, %v1117
  %v1245 = vadd.f32 %v1244, %v1118
  %v1246 = vadd.f32 %v1245, %v1119
  %v1247 = vadd.f32 %v1246, %v1120
  %v1248 = vadd.f32 %v1247, %v1121
  %v1249 = vadd.f32 %v1248, %v1122
  %v1250 = vadd.f32 %v1249, %v1123
  %v1251 = vadd.f32 %v1250, %v1124
  %v1252 = vadd.f32 %v1251, %v1125
  %v1253 = vadd.f32 %v1252, %v1126
  %v1254 = vadd.f32 %v1253, %v1127
  %v1255 = vadd.f32 %v1254, %v1128
  %v1256 = vadd.f32 %v1255, %v1129
  %v1257 = vadd.f32 %v1256, %v1130
  %v1258 = vadd.f32 %v1257, %v1131
  %v1259 = vadd.f32 %v1258, %v1132
  %v1260 = vadd.f32 %v1259, %v1133
  %v1261 = vadd.f32 %v1260, %v1134
  %v1262 = vadd.f32 %v1261, %v1135
  %v1263 = vadd.f32 %v1262, %v1136
  %v1264 = vadd.f32 %v1263, %v1137
  %v1265 = vadd.f32 %v1264, %v1138
  %v1266 = vadd.f32 %v1265, %v1139
  %v1267 = vadd.f32 %v1266, %v1140
  %v1268 = vadd.f32 %v1267, %v1141
  %v1269 = vadd.f32 %v1268, %v1142
  %v1270 = vadd.f32 %v1269, %v1143
  %v1271 = vadd.f32 %v1270, %v1144
  %v1272 = vadd.f32 %v1271, %v1145
  %v1273 = vadd.f32 %v1272, %v1146
  %v1274 = vadd.f32 %v1273, %v1147
  %v1275 = vadd.f32 %v1274, %v1148
  %v1276 = vadd.f32 %v1275, %v1149
  %v1277 = vadd.f32 %v1276, %v1150
  %v1278 = vadd.f32 %v1277, %v1151
  %v1279 = vadd.f32 %v1278, %v1152
  %v1280 = vadd.f32 %v1279, %v1153
  %v1281 = vadd.f32 %v1280, %v1154
  %v1282 = vadd.f32 %v1281, %v1155
  %v1283 = vadd.f32 %v1282, %v1156
  %v1284 = vadd.f32 %v1283, %v1157
  %v1285 = vadd.f32 %v1284, %v1158
  %v1286 = vadd.f32 %v1285, %v1159
  %v1287 = vadd.f32 %v1286, %v1160
  %v1288 = vadd.f32 %v1287, %v1161
  %v1289 = vadd.f32 %v1288, %v1162
  %v1290 = vadd.f32 %v1289, %v1163
  %v1291 = vadd.f32 %v1290, %v1164
  %v1292 = vadd.f32 %v1291, %v1165
  %v1293 = vadd.f32 %v1292, %v1166
  %v1294 = vadd.f32 %v1293, %v1167
  %v1295 = vadd.f32 %v1294, %v1168
  %v1296 = vadd.f32 %v1295, %v1169
  %v1297 = vadd.f32 %v1296, %v1170
  %v1298 = vadd.f32 %v1297, %v1171
  %v1299 = vadd.f32 %v1298, %v1172
  %v1300 = vadd.f32 %v1299, %v1173
  %v1301 = vadd.f32 %v1300, %v1174
  %v1302 = vadd.f32 %v1301, %v1175
  %v1303 = vadd.f32 %v1302, %v1176
  %v1304 = vadd.f32 %v1303, %v1177
  %v1305 = vadd.f32 %v1304, %v1178
  %v1306 = vadd.f32 %v1305, %v1179
  %v1307 = vadd.f32 %v1306, %v1180
  %v1308 = vadd.f32 %v1307, %v1181
  %v1309 = vadd.f32 %v1308, %v1182
  %v1310 = vadd.f32 %v1309, %v1183
  %v1311 = vadd.f32 %v1310, %v1184
  %v1312 = vadd.f32 %v1311, %v1185
  %v1313 = vadd.f32 %v1312, %v1186
  %v1314 = vadd.f32 %v1313, %v1187
  %v1315 = vrot.slane %v1314, 4
  %v1316 = vadd.f32 %v1314, %v1315
  %v1317 = vrot.slane %v1316, 2
  %v1318 = vadd.f32 %v1316, %v1317
  %v1319 = vrot.slane %v1318, 1
  %v1320 = vadd.f32 %v1318, %v1319
  %v1321 = vmul.f32 %v1320, 0.0009765625
  %v1322 = vmul.f32 %v1059, %v1059
  %v1323 = vsub.f32 %v1321, %v1322
  %v1324 = vmax.f32 %v1323, 0.0
  %v1325 = vadd.f32 %v1324, 1e-05
  %v1326 = vrsqrt.pop %v1325
  %v1327 = vmul.f32 %v1326, %v1325
  %v1328 = vmul.f32 %v1327, %v1326
  %v1329 = vmul.f32 0.5, %v1328
  %v1330 = vsub.f32 1.5, %v1329
  %v1331 = vmul.f32 %v1326, %v1330
  %vm1332 = vweird.f32 %v1325
  %vm1333 = vweird.f32 %v1326
  %vm1334 = vmor %vm1332, %vm1333
  %v1335 = vsel %vm1334, %v1326, %v1331
  %v1336 = vmul.f32 %v164, %v1335
  %v1337 = vadd.f32 %v1059, %v164
  %v1338 = vsub.f32 %v164, %v1337
  %v1340 = vrot.slane %v1336, 1
  %v1342 = vmul.f32 %v1338, %v1340
  %v1344 = vrot.slane %v1342, 6
  %v1346 = vadd.f32 %v164, %v1344
  %v1347 = vperm.slane %v1336, 1
  %v1348 = vmul.f32 %v607, %v1347
  %v1349 = vmul.f32 %v609, %v1347
  %v1350 = vmul.f32 %v612, %v1347
  %v1351 = vmul.f32 %v614, %v1347
  %v1352 = vmul.f32 %v617, %v1347
  %v1353 = vmul.f32 %v619, %v1347
  %v1354 = vmul.f32 %v622, %v1347
  %v1355 = vmul.f32 %v624, %v1347
  %v1356 = vmul.f32 %v627, %v1347
  %v1357 = vmul.f32 %v629, %v1347
  %v1358 = vmul.f32 %v632, %v1347
  %v1359 = vmul.f32 %v634, %v1347
  %v1360 = vmul.f32 %v637, %v1347
  %v1361 = vmul.f32 %v639, %v1347
  %v1362 = vmul.f32 %v642, %v1347
  %v1363 = vmul.f32 %v644, %v1347
  %v1364 = vmul.f32 %v647, %v1347
  %v1365 = vmul.f32 %v649, %v1347
  %v1366 = vmul.f32 %v652, %v1347
  %v1367 = vmul.f32 %v654, %v1347
  %v1368 = vmul.f32 %v657, %v1347
  %v1369 = vmul.f32 %v659, %v1347
  %v1370 = vmul.f32 %v662, %v1347
  %v1371 = vmul.f32 %v664, %v1347
  %v1372 = vmul.f32 %v667, %v1347
  %v1373 = vmul.f32 %v669, %v1347
  %v1374 = vmul.f32 %v672, %v1347
  %v1375 = vmul.f32 %v674, %v1347
  %v1376 = vmul.f32 %v677, %v1347
  %v1377 = vmul.f32 %v679, %v1347
  %v1378 = vmul.f32 %v682, %v1347
  %v1379 = vmul.f32 %v684, %v1347
  %v1380 = vmul.f32 %v687, %v1347
  %v1381 = vmul.f32 %v689, %v1347
  %v1382 = vmul.f32 %v692, %v1347
  %v1383 = vmul.f32 %v694, %v1347
  %v1384 = vmul.f32 %v697, %v1347
  %v1385 = vmul.f32 %v699, %v1347
  %v1386 = vmul.f32 %v702, %v1347
  %v1387 = vmul.f32 %v704, %v1347
  %v1388 = vmul.f32 %v707, %v1347
  %v1389 = vmul.f32 %v709, %v1347
  %v1390 = vmul.f32 %v712, %v1347
  %v1391 = vmul.f32 %v714, %v1347
  %v1392 = vmul.f32 %v717, %v1347
  %v1393 = vmul.f32 %v719, %v1347
  %v1394 = vmul.f32 %v722, %v1347
  %v1395 = vmul.f32 %v724, %v1347
  %v1396 = vmul.f32 %v727, %v1347
  %v1397 = vmul.f32 %v729, %v1347
  %v1398 = vmul.f32 %v732, %v1347
  %v1399 = vmul.f32 %v734, %v1347
  %v1400 = vmul.f32 %v737, %v1347
  %v1401 = vmul.f32 %v739, %v1347
  %v1402 = vmul.f32 %v742, %v1347
  %v1403 = vmul.f32 %v744, %v1347
  %v1404 = vmul.f32 %v747, %v1347
  %v1405 = vmul.f32 %v749, %v1347
  %v1406 = vmul.f32 %v752, %v1347
  %v1407 = vmul.f32 %v754, %v1347
  %v1408 = vmul.f32 %v757, %v1347
  %v1409 = vmul.f32 %v759, %v1347
  %v1410 = vmul.f32 %v762, %v1347
  %v1411 = vmul.f32 %v764, %v1347
  %v1412 = vmul.f32 %v767, %v1347
  %v1413 = vmul.f32 %v769, %v1347
  %v1414 = vmul.f32 %v772, %v1347
  %v1415 = vmul.f32 %v774, %v1347
  %v1416 = vmul.f32 %v777, %v1347
  %v1417 = vmul.f32 %v779, %v1347
  %v1418 = vmul.f32 %v782, %v1347
  %v1419 = vmul.f32 %v784, %v1347
  %v1420 = vmul.f32 %v787, %v1347
  %v1421 = vmul.f32 %v789, %v1347
  %v1422 = vmul.f32 %v792, %v1347
  %v1423 = vmul.f32 %v794, %v1347
  %v1424 = vmul.f32 %v797, %v1347
  %v1425 = vmul.f32 %v799, %v1347
  %v1426 = vmul.f32 %v802, %v1347
  %v1427 = vmul.f32 %v804, %v1347
  %v1428 = vmul.f32 %v807, %v1347
  %v1429 = vmul.f32 %v809, %v1347
  %v1430 = vmul.f32 %v812, %v1347
  %v1431 = vmul.f32 %v814, %v1347
  %v1432 = vmul.f32 %v817, %v1347
  %v1433 = vmul.f32 %v819, %v1347
  %v1434 = vmul.f32 %v822, %v1347
  %v1435 = vmul.f32 %v824, %v1347
  %v1436 = vmul.f32 %v827, %v1347
  %v1437 = vmul.f32 %v829, %v1347
  %v1438 = vmul.f32 %v832, %v1347
  %v1439 = vmul.f32 %v834, %v1347
  %v1440 = vmul.f32 %v837, %v1347
  %v1441 = vmul.f32 %v839, %v1347
  %v1442 = vmul.f32 %v842, %v1347
  %v1443 = vmul.f32 %v844, %v1347
  %v1444 = vmul.f32 %v847, %v1347
  %v1445 = vmul.f32 %v849, %v1347
  %v1446 = vmul.f32 %v852, %v1347
  %v1447 = vmul.f32 %v854, %v1347
  %v1448 = vmul.f32 %v857, %v1347
  %v1449 = vmul.f32 %v859, %v1347
  %v1450 = vmul.f32 %v862, %v1347
  %v1451 = vmul.f32 %v864, %v1347
  %v1452 = vmul.f32 %v867, %v1347
  %v1453 = vmul.f32 %v869, %v1347
  %v1454 = vmul.f32 %v872, %v1347
  %v1455 = vmul.f32 %v874, %v1347
  %v1456 = vmul.f32 %v877, %v1347
  %v1457 = vmul.f32 %v879, %v1347
  %v1458 = vmul.f32 %v882, %v1347
  %v1459 = vmul.f32 %v884, %v1347
  %v1460 = vmul.f32 %v887, %v1347
  %v1461 = vmul.f32 %v889, %v1347
  %v1462 = vmul.f32 %v892, %v1347
  %v1463 = vmul.f32 %v894, %v1347
  %v1464 = vmul.f32 %v897, %v1347
  %v1465 = vmul.f32 %v899, %v1347
  %v1466 = vmul.f32 %v902, %v1347
  %v1467 = vmul.f32 %v904, %v1347
  %v1468 = vmul.f32 %v907, %v1347
  %v1469 = vmul.f32 %v909, %v1347
  %v1470 = vmul.f32 %v912, %v1347
  %v1471 = vmul.f32 %v914, %v1347
  %v1472 = vmul.f32 %v917, %v1347
  %v1473 = vmul.f32 %v919, %v1347
  %v1474 = vmul.f32 %v922, %v1347
  %v1475 = vmul.f32 %v924, %v1347
  %v1476 = vperm.slane %v1346, 2
  %v1477 = vadd.f32 %v1348, %v1476
  %v1478 = vadd.f32 %v1349, %v1476
  %v1479 = vadd.f32 %v1350, %v1476
  %v1480 = vadd.f32 %v1351, %v1476
  %v1481 = vadd.f32 %v1352, %v1476
  %v1482 = vadd.f32 %v1353, %v1476
  %v1483 = vadd.f32 %v1354, %v1476
  %v1484 = vadd.f32 %v1355, %v1476
  %v1485 = vadd.f32 %v1356, %v1476
  %v1486 = vadd.f32 %v1357, %v1476
  %v1487 = vadd.f32 %v1358, %v1476
  %v1488 = vadd.f32 %v1359, %v1476
  %v1489 = vadd.f32 %v1360, %v1476
  %v1490 = vadd.f32 %v1361, %v1476
  %v1491 = vadd.f32 %v1362, %v1476
  %v1492 = vadd.f32 %v1363, %v1476
  %v1493 = vadd.f32 %v1364, %v1476
  %v1494 = vadd.f32 %v1365, %v1476
  %v1495 = vadd.f32 %v1366, %v1476
  %v1496 = vadd.f32 %v1367, %v1476
  %v1497 = vadd.f32 %v1368, %v1476
  %v1498 = vadd.f32 %v1369, %v1476
  %v1499 = vadd.f32 %v1370, %v1476
  %v1500 = vadd.f32 %v1371, %v1476
  %v1501 = vadd.f32 %v1372, %v1476
  %v1502 = vadd.f32 %v1373, %v1476
  %v1503 = vadd.f32 %v1374, %v1476
  %v1504 = vadd.f32 %v1375, %v1476
  %v1505 = vadd.f32 %v1376, %v1476
  %v1506 = vadd.f32 %v1377, %v1476
  %v1507 = vadd.f32 %v1378, %v1476
  %v1508 = vadd.f32 %v1379, %v1476
  %v1509 = vadd.f32 %v1380, %v1476
  %v1510 = vadd.f32 %v1381, %v1476
  %v1511 = vadd.f32 %v1382, %v1476
  %v1512 = vadd.f32 %v1383, %v1476
  %v1513 = vadd.f32 %v1384, %v1476
  %v1514 = vadd.f32 %v1385, %v1476
  %v1515 = vadd.f32 %v1386, %v1476
  %v1516 = vadd.f32 %v1387, %v1476
  %v1517 = vadd.f32 %v1388, %v1476
  %v1518 = vadd.f32 %v1389, %v1476
  %v1519 = vadd.f32 %v1390, %v1476
  %v1520 = vadd.f32 %v1391, %v1476
  %v1521 = vadd.f32 %v1392, %v1476
  %v1522 = vadd.f32 %v1393, %v1476
  %v1523 = vadd.f32 %v1394, %v1476
  %v1524 = vadd.f32 %v1395, %v1476
  %v1525 = vadd.f32 %v1396, %v1476
  %v1526 = vadd.f32 %v1397, %v1476
  %v1527 = vadd.f32 %v1398, %v1476
  %v1528 = vadd.f32 %v1399, %v1476
  %v1529 = vadd.f32 %v1400, %v1476
  %v1530 = vadd.f32 %v1401, %v1476
  %v1531 = vadd.f32 %v1402, %v1476
  %v1532 = vadd.f32 %v1403, %v1476
  %v1533 = vadd.f32 %v1404, %v1476
  %v1534 = vadd.f32 %v1405, %v1476
  %v1535 = vadd.f32 %v1406, %v1476
  %v1536 = vadd.f32 %v1407, %v1476
  %v1537 = vadd.f32 %v1408, %v1476
  %v1538 = vadd.f32 %v1409, %v1476
  %v1539 = vadd.f32 %v1410, %v1476
  %v1540 = vadd.f32 %v1411, %v1476
  %v1541 = vadd.f32 %v1412, %v1476
  %v1542 = vadd.f32 %v1413, %v1476
  %v1543 = vadd.f32 %v1414, %v1476
  %v1544 = vadd.f32 %v1415, %v1476
  %v1545 = vadd.f32 %v1416, %v1476
  %v1546 = vadd.f32 %v1417, %v1476
  %v1547 = vadd.f32 %v1418, %v1476
  %v1548 = vadd.f32 %v1419, %v1476
  %v1549 = vadd.f32 %v1420, %v1476
  %v1550 = vadd.f32 %v1421, %v1476
  %v1551 = vadd.f32 %v1422, %v1476
  %v1552 = vadd.f32 %v1423, %v1476
  %v1553 = vadd.f32 %v1424, %v1476
  %v1554 = vadd.f32 %v1425, %v1476
  %v1555 = vadd.f32 %v1426, %v1476
  %v1556 = vadd.f32 %v1427, %v1476
  %v1557 = vadd.f32 %v1428, %v1476
  %v1558 = vadd.f32 %v1429, %v1476
  %v1559 = vadd.f32 %v1430, %v1476
  %v1560 = vadd.f32 %v1431, %v1476
  %v1561 = vadd.f32 %v1432, %v1476
  %v1562 = vadd.f32 %v1433, %v1476
  %v1563 = vadd.f32 %v1434, %v1476
  %v1564 = vadd.f32 %v1435, %v1476
  %v1565 = vadd.f32 %v1436, %v1476
  %v1566 = vadd.f32 %v1437, %v1476
  %v1567 = vadd.f32 %v1438, %v1476
  %v1568 = vadd.f32 %v1439, %v1476
  %v1569 = vadd.f32 %v1440, %v1476
  %v1570 = vadd.f32 %v1441, %v1476
  %v1571 = vadd.f32 %v1442, %v1476
  %v1572 = vadd.f32 %v1443, %v1476
  %v1573 = vadd.f32 %v1444, %v1476
  %v1574 = vadd.f32 %v1445, %v1476
  %v1575 = vadd.f32 %v1446, %v1476
  %v1576 = vadd.f32 %v1447, %v1476
  %v1577 = vadd.f32 %v1448, %v1476
  %v1578 = vadd.f32 %v1449, %v1476
  %v1579 = vadd.f32 %v1450, %v1476
  %v1580 = vadd.f32 %v1451, %v1476
  %v1581 = vadd.f32 %v1452, %v1476
  %v1582 = vadd.f32 %v1453, %v1476
  %v1583 = vadd.f32 %v1454, %v1476
  %v1584 = vadd.f32 %v1455, %v1476
  %v1585 = vadd.f32 %v1456, %v1476
  %v1586 = vadd.f32 %v1457, %v1476
  %v1587 = vadd.f32 %v1458, %v1476
  %v1588 = vadd.f32 %v1459, %v1476
  %v1589 = vadd.f32 %v1460, %v1476
  %v1590 = vadd.f32 %v1461, %v1476
  %v1591 = vadd.f32 %v1462, %v1476
  %v1592 = vadd.f32 %v1463, %v1476
  %v1593 = vadd.f32 %v1464, %v1476
  %v1594 = vadd.f32 %v1465, %v1476
  %v1595 = vadd.f32 %v1466, %v1476
  %v1596 = vadd.f32 %v1467, %v1476
  %v1597 = vadd.f32 %v1468, %v1476
  %v1598 = vadd.f32 %v1469, %v1476
  %v1599 = vadd.f32 %v1470, %v1476
  %v1600 = vadd.f32 %v1471, %v1476
  %v1601 = vadd.f32 %v1472, %v1476
  %v1602 = vadd.f32 %v1473, %v1476
  %v1603 = vadd.f32 %v1474, %v1476
  %v1604 = vadd.f32 %v1475, %v1476
  %v1605 = vmax.f32 %v1477, 0.0
  %v1606 = vmax.f32 %v1478, 0.0
  %v1607 = vmax.f32 %v1479, 0.0
  %v1608 = vmax.f32 %v1480, 0.0
  %v1609 = vmax.f32 %v1481, 0.0
  %v1610 = vmax.f32 %v1482, 0.0
  %v1611 = vmax.f32 %v1483, 0.0
  %v1612 = vmax.f32 %v1484, 0.0
  %v1613 = vmax.f32 %v1485, 0.0
  %v1614 = vmax.f32 %v1486, 0.0
  %v1615 = vmax.f32 %v1487, 0.0
  %v1616 = vmax.f32 %v1488, 0.0
  %v1617 = vmax.f32 %v1489, 0.0
  %v1618 = vmax.f32 %v1490, 0.0
  %v1619 = vmax.f32 %v1491, 0.0
  %v1620 = vmax.f32 %v1492, 0.0
  %v1621 = vmax.f32 %v1493, 0.0
  %v1622 = vmax.f32 %v1494, 0.0
  %v1623 = vmax.f32 %v1495, 0.0
  %v1624 = vmax.f32 %v1496, 0.0
  %v1625 = vmax.f32 %v1497, 0.0
  %v1626 = vmax.f32 %v1498, 0.0
  %v1627 = vmax.f32 %v1499, 0.0
  %v1628 = vmax.f32 %v1500, 0.0
  %v1629 = vmax.f32 %v1501, 0.0
  %v1630 = vmax.f32 %v1502, 0.0
  %v1631 = vmax.f32 %v1503, 0.0
  %v1632 = vmax.f32 %v1504, 0.0
  %v1633 = vmax.f32 %v1505, 0.0
  %v1634 = vmax.f32 %v1506, 0.0
  %v1635 = vmax.f32 %v1507, 0.0
  %v1636 = vmax.f32 %v1508, 0.0
  %v1637 = vmax.f32 %v1509, 0.0
  %v1638 = vmax.f32 %v1510, 0.0
  %v1639 = vmax.f32 %v1511, 0.0
  %v1640 = vmax.f32 %v1512, 0.0
  %v1641 = vmax.f32 %v1513, 0.0
  %v1642 = vmax.f32 %v1514, 0.0
  %v1643 = vmax.f32 %v1515, 0.0
  %v1644 = vmax.f32 %v1516, 0.0
  %v1645 = vmax.f32 %v1517, 0.0
  %v1646 = vmax.f32 %v1518, 0.0
  %v1647 = vmax.f32 %v1519, 0.0
  %v1648 = vmax.f32 %v1520, 0.0
  %v1649 = vmax.f32 %v1521, 0.0
  %v1650 = vmax.f32 %v1522, 0.0
  %v1651 = vmax.f32 %v1523, 0.0
  %v1652 = vmax.f32 %v1524, 0.0
  %v1653 = vmax.f32 %v1525, 0.0
  %v1654 = vmax.f32 %v1526, 0.0
  %v1655 = vmax.f32 %v1527, 0.0
  %v1656 = vmax.f32 %v1528, 0.0
  %v1657 = vmax.f32 %v1529, 0.0
  %v1658 = vmax.f32 %v1530, 0.0
  %v1659 = vmax.f32 %v1531, 0.0
  %v1660 = vmax.f32 %v1532, 0.0
  %v1661 = vmax.f32 %v1533, 0.0
  %v1662 = vmax.f32 %v1534, 0.0
  %v1663 = vmax.f32 %v1535, 0.0
  %v1664 = vmax.f32 %v1536, 0.0
  %v1665 = vmax.f32 %v1537, 0.0
  %v1666 = vmax.f32 %v1538, 0.0
  %v1667 = vmax.f32 %v1539, 0.0
  %v1668 = vmax.f32 %v1540, 0.0
  %v1669 = vmax.f32 %v1541, 0.0
  %v1670 = vmax.f32 %v1542, 0.0
  %v1671 = vmax.f32 %v1543, 0.0
  %v1672 = vmax.f32 %v1544, 0.0
  %v1673 = vmax.f32 %v1545, 0.0
  %v1674 = vmax.f32 %v1546, 0.0
  %v1675 = vmax.f32 %v1547, 0.0
  %v1676 = vmax.f32 %v1548, 0.0
  %v1677 = vmax.f32 %v1549, 0.0
  %v1678 = vmax.f32 %v1550, 0.0
  %v1679 = vmax.f32 %v1551, 0.0
  %v1680 = vmax.f32 %v1552, 0.0
  %v1681 = vmax.f32 %v1553, 0.0
  %v1682 = vmax.f32 %v1554, 0.0
  %v1683 = vmax.f32 %v1555, 0.0
  %v1684 = vmax.f32 %v1556, 0.0
  %v1685 = vmax.f32 %v1557, 0.0
  %v1686 = vmax.f32 %v1558, 0.0
  %v1687 = vmax.f32 %v1559, 0.0
  %v1688 = vmax.f32 %v1560, 0.0
  %v1689 = vmax.f32 %v1561, 0.0
  %v1690 = vmax.f32 %v1562, 0.0
  %v1691 = vmax.f32 %v1563, 0.0
  %v1692 = vmax.f32 %v1564, 0.0
  %v1693 = vmax.f32 %v1565, 0.0
  %v1694 = vmax.f32 %v1566, 0.0
  %v1695 = vmax.f32 %v1567, 0.0
  %v1696 = vmax.f32 %v1568, 0.0
  %v1697 = vmax.f32 %v1569, 0.0
  %v1698 = vmax.f32 %v1570, 0.0
  %v1699 = vmax.f32 %v1571, 0.0
  %v1700 = vmax.f32 %v1572, 0.0
  %v1701 = vmax.f32 %v1573, 0.0
  %v1702 = vmax.f32 %v1574, 0.0
  %v1703 = vmax.f32 %v1575, 0.0
  %v1704 = vmax.f32 %v1576, 0.0
  %v1705 = vmax.f32 %v1577, 0.0
  %v1706 = vmax.f32 %v1578, 0.0
  %v1707 = vmax.f32 %v1579, 0.0
  %v1708 = vmax.f32 %v1580, 0.0
  %v1709 = vmax.f32 %v1581, 0.0
  %v1710 = vmax.f32 %v1582, 0.0
  %v1711 = vmax.f32 %v1583, 0.0
  %v1712 = vmax.f32 %v1584, 0.0
  %v1713 = vmax.f32 %v1585, 0.0
  %v1714 = vmax.f32 %v1586, 0.0
  %v1715 = vmax.f32 %v1587, 0.0
  %v1716 = vmax.f32 %v1588, 0.0
  %v1717 = vmax.f32 %v1589, 0.0
  %v1718 = vmax.f32 %v1590, 0.0
  %v1719 = vmax.f32 %v1591, 0.0
  %v1720 = vmax.f32 %v1592, 0.0
  %v1721 = vmax.f32 %v1593, 0.0
  %v1722 = vmax.f32 %v1594, 0.0
  %v1723 = vmax.f32 %v1595, 0.0
  %v1724 = vmax.f32 %v1596, 0.0
  %v1725 = vmax.f32 %v1597, 0.0
  %v1726 = vmax.f32 %v1598, 0.0
  %v1727 = vmax.f32 %v1599, 0.0
  %v1728 = vmax.f32 %v1600, 0.0
  %v1729 = vmax.f32 %v1601, 0.0
  %v1730 = vmax.f32 %v1602, 0.0
  %v1731 = vmax.f32 %v1603, 0.0
  %v1732 = vmax.f32 %v1604, 0.0
  %v1733 = vpack.c.bf16 %v1606, %v1605
  %v1734 = vpack.c.bf16 %v1608, %v1607
  %v1735 = vpack.c.bf16 %v1610, %v1609
  %v1736 = vpack.c.bf16 %v1612, %v1611
  %v1737 = vpack.c.bf16 %v1614, %v1613
  %v1738 = vpack.c.bf16 %v1616, %v1615
  %v1739 = vpack.c.bf16 %v1618, %v1617
  %v1740 = vpack.c.bf16 %v1620, %v1619
  %v1741 = vpack.c.bf16 %v1622, %v1621
  %v1742 = vpack.c.bf16 %v1624, %v1623
  %v1743 = vpack.c.bf16 %v1626, %v1625
  %v1744 = vpack.c.bf16 %v1628, %v1627
  %v1745 = vpack.c.bf16 %v1630, %v1629
  %v1746 = vpack.c.bf16 %v1632, %v1631
  %v1747 = vpack.c.bf16 %v1634, %v1633
  %v1748 = vpack.c.bf16 %v1636, %v1635
  %v1749 = vpack.c.bf16 %v1638, %v1637
  %v1750 = vpack.c.bf16 %v1640, %v1639
  %v1751 = vpack.c.bf16 %v1642, %v1641
  %v1752 = vpack.c.bf16 %v1644, %v1643
  %v1753 = vpack.c.bf16 %v1646, %v1645
  %v1754 = vpack.c.bf16 %v1648, %v1647
  %v1755 = vpack.c.bf16 %v1650, %v1649
  %v1756 = vpack.c.bf16 %v1652, %v1651
  %v1757 = vpack.c.bf16 %v1654, %v1653
  %v1758 = vpack.c.bf16 %v1656, %v1655
  %v1759 = vpack.c.bf16 %v1658, %v1657
  %v1760 = vpack.c.bf16 %v1660, %v1659
  %v1761 = vpack.c.bf16 %v1662, %v1661
  %v1762 = vpack.c.bf16 %v1664, %v1663
  %v1763 = vpack.c.bf16 %v1666, %v1665
  %v1764 = vpack.c.bf16 %v1668, %v1667
  %v1765 = vpack.c.bf16 %v1670, %v1669
  %v1766 = vpack.c.bf16 %v1672, %v1671
  %v1767 = vpack.c.bf16 %v1674, %v1673
  %v1768 = vpack.c.bf16 %v1676, %v1675
  %v1769 = vpack.c.bf16 %v1678, %v1677
  %v1770 = vpack.c.bf16 %v1680, %v1679
  %v1771 = vpack.c.bf16 %v1682, %v1681
  %v1772 = vpack.c.bf16 %v1684, %v1683
  %v1773 = vpack.c.bf16 %v1686, %v1685
  %v1774 = vpack.c.bf16 %v1688, %v1687
  %v1775 = vpack.c.bf16 %v1690, %v1689
  %v1776 = vpack.c.bf16 %v1692, %v1691
  %v1777 = vpack.c.bf16 %v1694, %v1693
  %v1778 = vpack.c.bf16 %v1696, %v1695
  %v1779 = vpack.c.bf16 %v1698, %v1697
  %v1780 = vpack.c.bf16 %v1700, %v1699
  %v1781 = vpack.c.bf16 %v1702, %v1701
  %v1782 = vpack.c.bf16 %v1704, %v1703
  %v1783 = vpack.c.bf16 %v1706, %v1705
  %v1784 = vpack.c.bf16 %v1708, %v1707
  %v1785 = vpack.c.bf16 %v1710, %v1709
  %v1786 = vpack.c.bf16 %v1712, %v1711
  %v1787 = vpack.c.bf16 %v1714, %v1713
  %v1788 = vpack.c.bf16 %v1716, %v1715
  %v1789 = vpack.c.bf16 %v1718, %v1717
  %v1790 = vpack.c.bf16 %v1720, %v1719
  %v1791 = vpack.c.bf16 %v1722, %v1721
  %v1792 = vpack.c.bf16 %v1724, %v1723
  %v1793 = vpack.c.bf16 %v1726, %v1725
  %v1794 = vpack.c.bf16 %v1728, %v1727
  %v1795 = vpack.c.bf16 %v1730, %v1729
  %v1796 = vpack.c.bf16 %v1732, %v1731
  %v1797 = vld [vmem:[%s3] sm:$0xf]
  %v1798 = vld [vmem:[%s3 + $0x4] sm:$0xf]
  %v1799 = vld [vmem:[%s3 + $0x8] sm:$0xf]
  %v1800 = vld [vmem:[%s3 + $0xc] sm:$0xf]
  %v1801 = vld [vmem:[%s3 + $0x10] sm:$0xf]
  %v1802 = vld [vmem:[%s3 + $0x14] sm:$0xf]
  %v1803 = vld [vmem:[%s3 + $0x18] sm:$0xf]
  %v1804 = vld [vmem:[%s3 + $0x1c] sm:$0xf]
  %v1805 = vld [vmem:[%s3 + $0x20] sm:$0xf]
  %v1806 = vld [vmem:[%s3 + $0x24] sm:$0xf]
  %v1807 = vld [vmem:[%s3 + $0x28] sm:$0xf]
  %v1808 = vld [vmem:[%s3 + $0x2c] sm:$0xf]
  %v1809 = vld [vmem:[%s3 + $0x30] sm:$0xf]
  %v1810 = vld [vmem:[%s3 + $0x34] sm:$0xf]
  %v1811 = vld [vmem:[%s3 + $0x38] sm:$0xf]
  %v1812 = vld [vmem:[%s3 + $0x3c] sm:$0xf]
  %v1813 = vld [vmem:[%s4] sm:$0x7]
  %v1830 = vunpack.c.l.b16 %v1797
  %v1831 = vunpack.c.l.b16 %v1798
  %v1832 = vunpack.c.l.b16 %v1799
  %v1833 = vunpack.c.l.b16 %v1800
  %v1834 = vunpack.c.l.b16 %v1801
  %v1835 = vunpack.c.l.b16 %v1802
  %v1836 = vunpack.c.l.b16 %v1803
  %v1837 = vunpack.c.l.b16 %v1804
  %v1838 = vunpack.c.l.b16 %v1805
  %v1839 = vunpack.c.l.b16 %v1806
  %v1840 = vunpack.c.l.b16 %v1807
  %v1841 = vunpack.c.l.b16 %v1808
  %v1842 = vunpack.c.l.b16 %v1809
  %v1843 = vunpack.c.l.b16 %v1810
  %v1844 = vunpack.c.l.b16 %v1811
  %v1845 = vunpack.c.l.b16 %v1812
  %v1846 = vpack.c.b16 %v1831, %v1830
  %v1847 = vpack.c.b16 %v1833, %v1832
  %v1848 = vpack.c.b16 %v1835, %v1834
  %v1849 = vpack.c.b16 %v1837, %v1836
  %v1850 = vpack.c.b16 %v1839, %v1838
  %v1851 = vpack.c.b16 %v1841, %v1840
  %v1852 = vpack.c.b16 %v1843, %v1842
  %v1853 = vpack.c.b16 %v1845, %v1844
  %1862 = vmatpush.bf16.msra.mxu0 %v1853
  %1863 = vmatpush.bf16.msra.mxu0 %v1852
  %1864 = vmatpush.bf16.msra.mxu0 %v1851
  %1865 = vmatpush.bf16.msra.mxu0 %v1850
  %1866 = vmatpush.bf16.msra.mxu0 %v1849
  %1867 = vmatpush.bf16.msra.mxu0 %v1848
  %1868 = vmatpush.bf16.msra.mxu0 %v1847
  %1869 = vmatpush.bf16.msra.mxu0 %v1846
  %1870 = vmatmul.bf16.gmra.mxu0 %v1733
  %v1871 = vpop.f32.mrf.mxu0
  %v1872 = vadd.f32 0.0, %v1871
  %v1873 = vpop.f32.mrf.mxu0
  %v1874 = vadd.f32 0.0, %v1873
  %1875 = vmatmul.bf16.gmra.mxu0 %v1734
  %v1876 = vpop.f32.mrf.mxu0
  %v1877 = vadd.f32 0.0, %v1876
  %v1878 = vpop.f32.mrf.mxu0
  %v1879 = vadd.f32 0.0, %v1878
  %1880 = vmatmul.bf16.gmra.mxu0 %v1735
  %v1881 = vpop.f32.mrf.mxu0
  %v1882 = vadd.f32 0.0, %v1881
  %v1883 = vpop.f32.mrf.mxu0
  %v1884 = vadd.f32 0.0, %v1883
  %1885 = vmatmul.bf16.gmra.mxu0 %v1736
  %v1886 = vpop.f32.mrf.mxu0
  %v1887 = vadd.f32 0.0, %v1886
  %v1888 = vpop.f32.mrf.mxu0
  %v1889 = vadd.f32 0.0, %v1888
  %1890 = vmatmul.bf16.gmra.mxu0 %v1737
  %v1891 = vpop.f32.mrf.mxu0
  %v1892 = vadd.f32 0.0, %v1891
  %v1893 = vpop.f32.mrf.mxu0
  %v1894 = vadd.f32 0.0, %v1893
  %1895 = vmatmul.bf16.gmra.mxu0 %v1738
  %v1896 = vpop.f32.mrf.mxu0
  %v1897 = vadd.f32 0.0, %v1896
  %v1898 = vpop.f32.mrf.mxu0
  %v1899 = vadd.f32 0.0, %v1898
  %1900 = vmatmul.bf16.gmra.mxu0 %v1739
  %v1901 = vpop.f32.mrf.mxu0
  %v1902 = vadd.f32 0.0, %v1901
  %v1903 = vpop.f32.mrf.mxu0
  %v1904 = vadd.f32 0.0, %v1903
  %1905 = vmatmul.bf16.gmra.mxu0 %v1740
  %v1906 = vpop.f32.mrf.mxu0
  %v1907 = vadd.f32 0.0, %v1906
  %v1908 = vpop.f32.mrf.mxu0
  %v1909 = vadd.f32 0.0, %v1908
  %1910 = vmatmul.bf16.gmra.mxu0 %v1741
  %v1911 = vpop.f32.mrf.mxu0
  %v1912 = vadd.f32 0.0, %v1911
  %v1913 = vpop.f32.mrf.mxu0
  %v1914 = vadd.f32 0.0, %v1913
  %1915 = vmatmul.bf16.gmra.mxu0 %v1742
  %v1916 = vpop.f32.mrf.mxu0
  %v1917 = vadd.f32 0.0, %v1916
  %v1918 = vpop.f32.mrf.mxu0
  %v1919 = vadd.f32 0.0, %v1918
  %1920 = vmatmul.bf16.gmra.mxu0 %v1743
  %v1921 = vpop.f32.mrf.mxu0
  %v1922 = vadd.f32 0.0, %v1921
  %v1923 = vpop.f32.mrf.mxu0
  %v1924 = vadd.f32 0.0, %v1923
  %1925 = vmatmul.bf16.gmra.mxu0 %v1744
  %v1926 = vpop.f32.mrf.mxu0
  %v1927 = vadd.f32 0.0, %v1926
  %v1928 = vpop.f32.mrf.mxu0
  %v1929 = vadd.f32 0.0, %v1928
  %1930 = vmatmul.bf16.gmra.mxu0 %v1745
  %v1931 = vpop.f32.mrf.mxu0
  %v1932 = vadd.f32 0.0, %v1931
  %v1933 = vpop.f32.mrf.mxu0
  %v1934 = vadd.f32 0.0, %v1933
  %1935 = vmatmul.bf16.gmra.mxu0 %v1746
  %v1936 = vpop.f32.mrf.mxu0
  %v1937 = vadd.f32 0.0, %v1936
  %v1938 = vpop.f32.mrf.mxu0
  %v1939 = vadd.f32 0.0, %v1938
  %1940 = vmatmul.bf16.gmra.mxu0 %v1747
  %v1941 = vpop.f32.mrf.mxu0
  %v1942 = vadd.f32 0.0, %v1941
  %v1943 = vpop.f32.mrf.mxu0
  %v1944 = vadd.f32 0.0, %v1943
  %1945 = vmatmul.bf16.gmra.mxu0 %v1748
  %v1946 = vpop.f32.mrf.mxu0
  %v1947 = vadd.f32 0.0, %v1946
  %v1948 = vpop.f32.mrf.mxu0
  %v1949 = vadd.f32 0.0, %v1948
  %1950 = vmatmul.bf16.gmra.mxu0 %v1749
  %v1951 = vpop.f32.mrf.mxu0
  %v1952 = vadd.f32 0.0, %v1951
  %v1953 = vpop.f32.mrf.mxu0
  %v1954 = vadd.f32 0.0, %v1953
  %1955 = vmatmul.bf16.gmra.mxu0 %v1750
  %v1956 = vpop.f32.mrf.mxu0
  %v1957 = vadd.f32 0.0, %v1956
  %v1958 = vpop.f32.mrf.mxu0
  %v1959 = vadd.f32 0.0, %v1958
  %1960 = vmatmul.bf16.gmra.mxu0 %v1751
  %v1961 = vpop.f32.mrf.mxu0
  %v1962 = vadd.f32 0.0, %v1961
  %v1963 = vpop.f32.mrf.mxu0
  %v1964 = vadd.f32 0.0, %v1963
  %1965 = vmatmul.bf16.gmra.mxu0 %v1752
  %v1966 = vpop.f32.mrf.mxu0
  %v1967 = vadd.f32 0.0, %v1966
  %v1968 = vpop.f32.mrf.mxu0
  %v1969 = vadd.f32 0.0, %v1968
  %1970 = vmatmul.bf16.gmra.mxu0 %v1753
  %v1971 = vpop.f32.mrf.mxu0
  %v1972 = vadd.f32 0.0, %v1971
  %v1973 = vpop.f32.mrf.mxu0
  %v1974 = vadd.f32 0.0, %v1973
  %1975 = vmatmul.bf16.gmra.mxu0 %v1754
  %v1976 = vpop.f32.mrf.mxu0
  %v1977 = vadd.f32 0.0, %v1976
  %v1978 = vpop.f32.mrf.mxu0
  %v1979 = vadd.f32 0.0, %v1978
  %1980 = vmatmul.bf16.gmra.mxu0 %v1755
  %v1981 = vpop.f32.mrf.mxu0
  %v1982 = vadd.f32 0.0, %v1981
  %v1983 = vpop.f32.mrf.mxu0
  %v1984 = vadd.f32 0.0, %v1983
  %1985 = vmatmul.bf16.gmra.mxu0 %v1756
  %v1986 = vpop.f32.mrf.mxu0
  %v1987 = vadd.f32 0.0, %v1986
  %v1988 = vpop.f32.mrf.mxu0
  %v1989 = vadd.f32 0.0, %v1988
  %1990 = vmatmul.bf16.gmra.mxu0 %v1757
  %v1991 = vpop.f32.mrf.mxu0
  %v1992 = vadd.f32 0.0, %v1991
  %v1993 = vpop.f32.mrf.mxu0
  %v1994 = vadd.f32 0.0, %v1993
  %1995 = vmatmul.bf16.gmra.mxu0 %v1758
  %v1996 = vpop.f32.mrf.mxu0
  %v1997 = vadd.f32 0.0, %v1996
  %v1998 = vpop.f32.mrf.mxu0
  %v1999 = vadd.f32 0.0, %v1998
  %2000 = vmatmul.bf16.gmra.mxu0 %v1759
  %v2001 = vpop.f32.mrf.mxu0
  %v2002 = vadd.f32 0.0, %v2001
  %v2003 = vpop.f32.mrf.mxu0
  %v2004 = vadd.f32 0.0, %v2003
  %2005 = vmatmul.bf16.gmra.mxu0 %v1760
  %v2006 = vpop.f32.mrf.mxu0
  %v2007 = vadd.f32 0.0, %v2006
  %v2008 = vpop.f32.mrf.mxu0
  %v2009 = vadd.f32 0.0, %v2008
  %2010 = vmatmul.bf16.gmra.mxu0 %v1761
  %v2011 = vpop.f32.mrf.mxu0
  %v2012 = vadd.f32 0.0, %v2011
  %v2013 = vpop.f32.mrf.mxu0
  %v2014 = vadd.f32 0.0, %v2013
  %2015 = vmatmul.bf16.gmra.mxu0 %v1762
  %v2016 = vpop.f32.mrf.mxu0
  %v2017 = vadd.f32 0.0, %v2016
  %v2018 = vpop.f32.mrf.mxu0
  %v2019 = vadd.f32 0.0, %v2018
  %2020 = vmatmul.bf16.gmra.mxu0 %v1763
  %v2021 = vpop.f32.mrf.mxu0
  %v2022 = vadd.f32 0.0, %v2021
  %v2023 = vpop.f32.mrf.mxu0
  %v2024 = vadd.f32 0.0, %v2023
  %2025 = vmatmul.bf16.gmra.mxu0 %v1764
  %v2026 = vpop.f32.mrf.mxu0
  %v2027 = vadd.f32 0.0, %v2026
  %v2028 = vpop.f32.mrf.mxu0
  %v2029 = vadd.f32 0.0, %v2028
  %2030 = vmatmul.bf16.gmra.mxu0 %v1765
  %v2031 = vpop.f32.mrf.mxu0
  %v2032 = vadd.f32 0.0, %v2031
  %v2033 = vpop.f32.mrf.mxu0
  %v2034 = vadd.f32 0.0, %v2033
  %2035 = vmatmul.bf16.gmra.mxu0 %v1766
  %v2036 = vpop.f32.mrf.mxu0
  %v2037 = vadd.f32 0.0, %v2036
  %v2038 = vpop.f32.mrf.mxu0
  %v2039 = vadd.f32 0.0, %v2038
  %2040 = vmatmul.bf16.gmra.mxu0 %v1767
  %v2041 = vpop.f32.mrf.mxu0
  %v2042 = vadd.f32 0.0, %v2041
  %v2043 = vpop.f32.mrf.mxu0
  %v2044 = vadd.f32 0.0, %v2043
  %2045 = vmatmul.bf16.gmra.mxu0 %v1768
  %v2046 = vpop.f32.mrf.mxu0
  %v2047 = vadd.f32 0.0, %v2046
  %v2048 = vpop.f32.mrf.mxu0
  %v2049 = vadd.f32 0.0, %v2048
  %2050 = vmatmul.bf16.gmra.mxu0 %v1769
  %v2051 = vpop.f32.mrf.mxu0
  %v2052 = vadd.f32 0.0, %v2051
  %v2053 = vpop.f32.mrf.mxu0
  %v2054 = vadd.f32 0.0, %v2053
  %2055 = vmatmul.bf16.gmra.mxu0 %v1770
  %v2056 = vpop.f32.mrf.mxu0
  %v2057 = vadd.f32 0.0, %v2056
  %v2058 = vpop.f32.mrf.mxu0
  %v2059 = vadd.f32 0.0, %v2058
  %2060 = vmatmul.bf16.gmra.mxu0 %v1771
  %v2061 = vpop.f32.mrf.mxu0
  %v2062 = vadd.f32 0.0, %v2061
  %v2063 = vpop.f32.mrf.mxu0
  %v2064 = vadd.f32 0.0, %v2063
  %2065 = vmatmul.bf16.gmra.mxu0 %v1772
  %v2066 = vpop.f32.mrf.mxu0
  %v2067 = vadd.f32 0.0, %v2066
  %v2068 = vpop.f32.mrf.mxu0
  %v2069 = vadd.f32 0.0, %v2068
  %2070 = vmatmul.bf16.gmra.mxu0 %v1773
  %v2071 = vpop.f32.mrf.mxu0
  %v2072 = vadd.f32 0.0, %v2071
  %v2073 = vpop.f32.mrf.mxu0
  %v2074 = vadd.f32 0.0, %v2073
  %2075 = vmatmul.bf16.gmra.mxu0 %v1774
  %v2076 = vpop.f32.mrf.mxu0
  %v2077 = vadd.f32 0.0, %v2076
  %v2078 = vpop.f32.mrf.mxu0
  %v2079 = vadd.f32 0.0, %v2078
  %2080 = vmatmul.bf16.gmra.mxu0 %v1775
  %v2081 = vpop.f32.mrf.mxu0
  %v2082 = vadd.f32 0.0, %v2081
  %v2083 = vpop.f32.mrf.mxu0
  %v2084 = vadd.f32 0.0, %v2083
  %2085 = vmatmul.bf16.gmra.mxu0 %v1776
  %v2086 = vpop.f32.mrf.mxu0
  %v2087 = vadd.f32 0.0, %v2086
  %v2088 = vpop.f32.mrf.mxu0
  %v2089 = vadd.f32 0.0, %v2088
  %2090 = vmatmul.bf16.gmra.mxu0 %v1777
  %v2091 = vpop.f32.mrf.mxu0
  %v2092 = vadd.f32 0.0, %v2091
  %v2093 = vpop.f32.mrf.mxu0
  %v2094 = vadd.f32 0.0, %v2093
  %2095 = vmatmul.bf16.gmra.mxu0 %v1778
  %v2096 = vpop.f32.mrf.mxu0
  %v2097 = vadd.f32 0.0, %v2096
  %v2098 = vpop.f32.mrf.mxu0
  %v2099 = vadd.f32 0.0, %v2098
  %2100 = vmatmul.bf16.gmra.mxu0 %v1779
  %v2101 = vpop.f32.mrf.mxu0
  %v2102 = vadd.f32 0.0, %v2101
  %v2103 = vpop.f32.mrf.mxu0
  %v2104 = vadd.f32 0.0, %v2103
  %2105 = vmatmul.bf16.gmra.mxu0 %v1780
  %v2106 = vpop.f32.mrf.mxu0
  %v2107 = vadd.f32 0.0, %v2106
  %v2108 = vpop.f32.mrf.mxu0
  %v2109 = vadd.f32 0.0, %v2108
  %2110 = vmatmul.bf16.gmra.mxu0 %v1781
  %v2111 = vpop.f32.mrf.mxu0
  %v2112 = vadd.f32 0.0, %v2111
  %v2113 = vpop.f32.mrf.mxu0
  %v2114 = vadd.f32 0.0, %v2113
  %2115 = vmatmul.bf16.gmra.mxu0 %v1782
  %v2116 = vpop.f32.mrf.mxu0
  %v2117 = vadd.f32 0.0, %v2116
  %v2118 = vpop.f32.mrf.mxu0
  %v2119 = vadd.f32 0.0, %v2118
  %2120 = vmatmul.bf16.gmra.mxu0 %v1783
  %v2121 = vpop.f32.mrf.mxu0
  %v2122 = vadd.f32 0.0, %v2121
  %v2123 = vpop.f32.mrf.mxu0
  %v2124 = vadd.f32 0.0, %v2123
  %2125 = vmatmul.bf16.gmra.mxu0 %v1784
  %v2126 = vpop.f32.mrf.mxu0
  %v2127 = vadd.f32 0.0, %v2126
  %v2128 = vpop.f32.mrf.mxu0
  %v2129 = vadd.f32 0.0, %v2128
  %2130 = vmatmul.bf16.gmra.mxu0 %v1785
  %v2131 = vpop.f32.mrf.mxu0
  %v2132 = vadd.f32 0.0, %v2131
  %v2133 = vpop.f32.mrf.mxu0
  %v2134 = vadd.f32 0.0, %v2133
  %2135 = vmatmul.bf16.gmra.mxu0 %v1786
  %v2136 = vpop.f32.mrf.mxu0
  %v2137 = vadd.f32 0.0, %v2136
  %v2138 = vpop.f32.mrf.mxu0
  %v2139 = vadd.f32 0.0, %v2138
  %2140 = vmatmul.bf16.gmra.mxu0 %v1787
  %v2141 = vpop.f32.mrf.mxu0
  %v2142 = vadd.f32 0.0, %v2141
  %v2143 = vpop.f32.mrf.mxu0
  %v2144 = vadd.f32 0.0, %v2143
  %2145 = vmatmul.bf16.gmra.mxu0 %v1788
  %v2146 = vpop.f32.mrf.mxu0
  %v2147 = vadd.f32 0.0, %v2146
  %v2148 = vpop.f32.mrf.mxu0
  %v2149 = vadd.f32 0.0, %v2148
  %2150 = vmatmul.bf16.gmra.mxu0 %v1789
  %v2151 = vpop.f32.mrf.mxu0
  %v2152 = vadd.f32 0.0, %v2151
  %v2153 = vpop.f32.mrf.mxu0
  %v2154 = vadd.f32 0.0, %v2153
  %2155 = vmatmul.bf16.gmra.mxu0 %v1790
  %v2156 = vpop.f32.mrf.mxu0
  %v2157 = vadd.f32 0.0, %v2156
  %v2158 = vpop.f32.mrf.mxu0
  %v2159 = vadd.f32 0.0, %v2158
  %2160 = vmatmul.bf16.gmra.mxu0 %v1791
  %v2161 = vpop.f32.mrf.mxu0
  %v2162 = vadd.f32 0.0, %v2161
  %v2163 = vpop.f32.mrf.mxu0
  %v2164 = vadd.f32 0.0, %v2163
  %2165 = vmatmul.bf16.gmra.mxu0 %v1792
  %v2166 = vpop.f32.mrf.mxu0
  %v2167 = vadd.f32 0.0, %v2166
  %v2168 = vpop.f32.mrf.mxu0
  %v2169 = vadd.f32 0.0, %v2168
  %2170 = vmatmul.bf16.gmra.mxu0 %v1793
  %v2171 = vpop.f32.mrf.mxu0
  %v2172 = vadd.f32 0.0, %v2171
  %v2173 = vpop.f32.mrf.mxu0
  %v2174 = vadd.f32 0.0, %v2173
  %2175 = vmatmul.bf16.gmra.mxu0 %v1794
  %v2176 = vpop.f32.mrf.mxu0
  %v2177 = vadd.f32 0.0, %v2176
  %v2178 = vpop.f32.mrf.mxu0
  %v2179 = vadd.f32 0.0, %v2178
  %2180 = vmatmul.bf16.gmra.mxu0 %v1795
  %v2181 = vpop.f32.mrf.mxu0
  %v2182 = vadd.f32 0.0, %v2181
  %v2183 = vpop.f32.mrf.mxu0
  %v2184 = vadd.f32 0.0, %v2183
  %2185 = vmatmul.bf16.gmra.mxu0 %v1796
  %v2186 = vpop.f32.mrf.mxu0
  %v2187 = vadd.f32 0.0, %v2186
  %v2188 = vpop.f32.mrf.mxu0
  %v2189 = vadd.f32 0.0, %v2188
  %2190 = vdwg.mxu0
  %v2191 = vadd.f32 %v1872, %v1874
  %v2192 = vadd.f32 %v2191, %v1877
  %v2193 = vadd.f32 %v2192, %v1879
  %v2194 = vadd.f32 %v2193, %v1882
  %v2195 = vadd.f32 %v2194, %v1884
  %v2196 = vadd.f32 %v2195, %v1887
  %v2197 = vadd.f32 %v2196, %v1889
  %v2198 = vadd.f32 %v2197, %v1892
  %v2199 = vadd.f32 %v2198, %v1894
  %v2200 = vadd.f32 %v2199, %v1897
  %v2201 = vadd.f32 %v2200, %v1899
  %v2202 = vadd.f32 %v2201, %v1902
  %v2203 = vadd.f32 %v2202, %v1904
  %v2204 = vadd.f32 %v2203, %v1907
  %v2205 = vadd.f32 %v2204, %v1909
  %v2206 = vadd.f32 %v2205, %v1912
  %v2207 = vadd.f32 %v2206, %v1914
  %v2208 = vadd.f32 %v2207, %v1917
  %v2209 = vadd.f32 %v2208, %v1919
  %v2210 = vadd.f32 %v2209, %v1922
  %v2211 = vadd.f32 %v2210, %v1924
  %v2212 = vadd.f32 %v2211, %v1927
  %v2213 = vadd.f32 %v2212, %v1929
  %v2214 = vadd.f32 %v2213, %v1932
  %v2215 = vadd.f32 %v2214, %v1934
  %v2216 = vadd.f32 %v2215, %v1937
  %v2217 = vadd.f32 %v2216, %v1939
  %v2218 = vadd.f32 %v2217, %v1942
  %v2219 = vadd.f32 %v2218, %v1944
  %v2220 = vadd.f32 %v2219, %v1947
  %v2221 = vadd.f32 %v2220, %v1949
  %v2222 = vadd.f32 %v2221, %v1952
  %v2223 = vadd.f32 %v2222, %v1954
  %v2224 = vadd.f32 %v2223, %v1957
  %v2225 = vadd.f32 %v2224, %v1959
  %v2226 = vadd.f32 %v2225, %v1962
  %v2227 = vadd.f32 %v2226, %v1964
  %v2228 = vadd.f32 %v2227, %v1967
  %v2229 = vadd.f32 %v2228, %v1969
  %v2230 = vadd.f32 %v2229, %v1972
  %v2231 = vadd.f32 %v2230, %v1974
  %v2232 = vadd.f32 %v2231, %v1977
  %v2233 = vadd.f32 %v2232, %v1979
  %v2234 = vadd.f32 %v2233, %v1982
  %v2235 = vadd.f32 %v2234, %v1984
  %v2236 = vadd.f32 %v2235, %v1987
  %v2237 = vadd.f32 %v2236, %v1989
  %v2238 = vadd.f32 %v2237, %v1992
  %v2239 = vadd.f32 %v2238, %v1994
  %v2240 = vadd.f32 %v2239, %v1997
  %v2241 = vadd.f32 %v2240, %v1999
  %v2242 = vadd.f32 %v2241, %v2002
  %v2243 = vadd.f32 %v2242, %v2004
  %v2244 = vadd.f32 %v2243, %v2007
  %v2245 = vadd.f32 %v2244, %v2009
  %v2246 = vadd.f32 %v2245, %v2012
  %v2247 = vadd.f32 %v2246, %v2014
  %v2248 = vadd.f32 %v2247, %v2017
  %v2249 = vadd.f32 %v2248, %v2019
  %v2250 = vadd.f32 %v2249, %v2022
  %v2251 = vadd.f32 %v2250, %v2024
  %v2252 = vadd.f32 %v2251, %v2027
  %v2253 = vadd.f32 %v2252, %v2029
  %v2254 = vadd.f32 %v2253, %v2032
  %v2255 = vadd.f32 %v2254, %v2034
  %v2256 = vadd.f32 %v2255, %v2037
  %v2257 = vadd.f32 %v2256, %v2039
  %v2258 = vadd.f32 %v2257, %v2042
  %v2259 = vadd.f32 %v2258, %v2044
  %v2260 = vadd.f32 %v2259, %v2047
  %v2261 = vadd.f32 %v2260, %v2049
  %v2262 = vadd.f32 %v2261, %v2052
  %v2263 = vadd.f32 %v2262, %v2054
  %v2264 = vadd.f32 %v2263, %v2057
  %v2265 = vadd.f32 %v2264, %v2059
  %v2266 = vadd.f32 %v2265, %v2062
  %v2267 = vadd.f32 %v2266, %v2064
  %v2268 = vadd.f32 %v2267, %v2067
  %v2269 = vadd.f32 %v2268, %v2069
  %v2270 = vadd.f32 %v2269, %v2072
  %v2271 = vadd.f32 %v2270, %v2074
  %v2272 = vadd.f32 %v2271, %v2077
  %v2273 = vadd.f32 %v2272, %v2079
  %v2274 = vadd.f32 %v2273, %v2082
  %v2275 = vadd.f32 %v2274, %v2084
  %v2276 = vadd.f32 %v2275, %v2087
  %v2277 = vadd.f32 %v2276, %v2089
  %v2278 = vadd.f32 %v2277, %v2092
  %v2279 = vadd.f32 %v2278, %v2094
  %v2280 = vadd.f32 %v2279, %v2097
  %v2281 = vadd.f32 %v2280, %v2099
  %v2282 = vadd.f32 %v2281, %v2102
  %v2283 = vadd.f32 %v2282, %v2104
  %v2284 = vadd.f32 %v2283, %v2107
  %v2285 = vadd.f32 %v2284, %v2109
  %v2286 = vadd.f32 %v2285, %v2112
  %v2287 = vadd.f32 %v2286, %v2114
  %v2288 = vadd.f32 %v2287, %v2117
  %v2289 = vadd.f32 %v2288, %v2119
  %v2290 = vadd.f32 %v2289, %v2122
  %v2291 = vadd.f32 %v2290, %v2124
  %v2292 = vadd.f32 %v2291, %v2127
  %v2293 = vadd.f32 %v2292, %v2129
  %v2294 = vadd.f32 %v2293, %v2132
  %v2295 = vadd.f32 %v2294, %v2134
  %v2296 = vadd.f32 %v2295, %v2137
  %v2297 = vadd.f32 %v2296, %v2139
  %v2298 = vadd.f32 %v2297, %v2142
  %v2299 = vadd.f32 %v2298, %v2144
  %v2300 = vadd.f32 %v2299, %v2147
  %v2301 = vadd.f32 %v2300, %v2149
  %v2302 = vadd.f32 %v2301, %v2152
  %v2303 = vadd.f32 %v2302, %v2154
  %v2304 = vadd.f32 %v2303, %v2157
  %v2305 = vadd.f32 %v2304, %v2159
  %v2306 = vadd.f32 %v2305, %v2162
  %v2307 = vadd.f32 %v2306, %v2164
  %v2308 = vadd.f32 %v2307, %v2167
  %v2309 = vadd.f32 %v2308, %v2169
  %v2310 = vadd.f32 %v2309, %v2172
  %v2311 = vadd.f32 %v2310, %v2174
  %v2312 = vadd.f32 %v2311, %v2177
  %v2313 = vadd.f32 %v2312, %v2179
  %v2314 = vadd.f32 %v2313, %v2182
  %v2315 = vadd.f32 %v2314, %v2184
  %v2316 = vadd.f32 %v2315, %v2187
  %v2317 = vadd.f32 %v2316, %v2189
  %v2318 = vrot.slane %v2317, 4
  %v2319 = vadd.f32 %v2317, %v2318
  %v2320 = vrot.slane %v2319, 2
  %v2321 = vadd.f32 %v2319, %v2320
  %v2322 = vrot.slane %v2321, 1
  %v2323 = vadd.f32 %v2321, %v2322
  %v2324 = vmul.f32 %v2323, 0.0009765625
  %v2325 = vmul.f32 %v1872, %v1872
  %v2326 = vmul.f32 %v1874, %v1874
  %v2327 = vmul.f32 %v1877, %v1877
  %v2328 = vmul.f32 %v1879, %v1879
  %v2329 = vmul.f32 %v1882, %v1882
  %v2330 = vmul.f32 %v1884, %v1884
  %v2331 = vmul.f32 %v1887, %v1887
  %v2332 = vmul.f32 %v1889, %v1889
  %v2333 = vmul.f32 %v1892, %v1892
  %v2334 = vmul.f32 %v1894, %v1894
  %v2335 = vmul.f32 %v1897, %v1897
  %v2336 = vmul.f32 %v1899, %v1899
  %v2337 = vmul.f32 %v1902, %v1902
  %v2338 = vmul.f32 %v1904, %v1904
  %v2339 = vmul.f32 %v1907, %v1907
  %v2340 = vmul.f32 %v1909, %v1909
  %v2341 = vmul.f32 %v1912, %v1912
  %v2342 = vmul.f32 %v1914, %v1914
  %v2343 = vmul.f32 %v1917, %v1917
  %v2344 = vmul.f32 %v1919, %v1919
  %v2345 = vmul.f32 %v1922, %v1922
  %v2346 = vmul.f32 %v1924, %v1924
  %v2347 = vmul.f32 %v1927, %v1927
  %v2348 = vmul.f32 %v1929, %v1929
  %v2349 = vmul.f32 %v1932, %v1932
  %v2350 = vmul.f32 %v1934, %v1934
  %v2351 = vmul.f32 %v1937, %v1937
  %v2352 = vmul.f32 %v1939, %v1939
  %v2353 = vmul.f32 %v1942, %v1942
  %v2354 = vmul.f32 %v1944, %v1944
  %v2355 = vmul.f32 %v1947, %v1947
  %v2356 = vmul.f32 %v1949, %v1949
  %v2357 = vmul.f32 %v1952, %v1952
  %v2358 = vmul.f32 %v1954, %v1954
  %v2359 = vmul.f32 %v1957, %v1957
  %v2360 = vmul.f32 %v1959, %v1959
  %v2361 = vmul.f32 %v1962, %v1962
  %v2362 = vmul.f32 %v1964, %v1964
  %v2363 = vmul.f32 %v1967, %v1967
  %v2364 = vmul.f32 %v1969, %v1969
  %v2365 = vmul.f32 %v1972, %v1972
  %v2366 = vmul.f32 %v1974, %v1974
  %v2367 = vmul.f32 %v1977, %v1977
  %v2368 = vmul.f32 %v1979, %v1979
  %v2369 = vmul.f32 %v1982, %v1982
  %v2370 = vmul.f32 %v1984, %v1984
  %v2371 = vmul.f32 %v1987, %v1987
  %v2372 = vmul.f32 %v1989, %v1989
  %v2373 = vmul.f32 %v1992, %v1992
  %v2374 = vmul.f32 %v1994, %v1994
  %v2375 = vmul.f32 %v1997, %v1997
  %v2376 = vmul.f32 %v1999, %v1999
  %v2377 = vmul.f32 %v2002, %v2002
  %v2378 = vmul.f32 %v2004, %v2004
  %v2379 = vmul.f32 %v2007, %v2007
  %v2380 = vmul.f32 %v2009, %v2009
  %v2381 = vmul.f32 %v2012, %v2012
  %v2382 = vmul.f32 %v2014, %v2014
  %v2383 = vmul.f32 %v2017, %v2017
  %v2384 = vmul.f32 %v2019, %v2019
  %v2385 = vmul.f32 %v2022, %v2022
  %v2386 = vmul.f32 %v2024, %v2024
  %v2387 = vmul.f32 %v2027, %v2027
  %v2388 = vmul.f32 %v2029, %v2029
  %v2389 = vmul.f32 %v2032, %v2032
  %v2390 = vmul.f32 %v2034, %v2034
  %v2391 = vmul.f32 %v2037, %v2037
  %v2392 = vmul.f32 %v2039, %v2039
  %v2393 = vmul.f32 %v2042, %v2042
  %v2394 = vmul.f32 %v2044, %v2044
  %v2395 = vmul.f32 %v2047, %v2047
  %v2396 = vmul.f32 %v2049, %v2049
  %v2397 = vmul.f32 %v2052, %v2052
  %v2398 = vmul.f32 %v2054, %v2054
  %v2399 = vmul.f32 %v2057, %v2057
  %v2400 = vmul.f32 %v2059, %v2059
  %v2401 = vmul.f32 %v2062, %v2062
  %v2402 = vmul.f32 %v2064, %v2064
  %v2403 = vmul.f32 %v2067, %v2067
  %v2404 = vmul.f32 %v2069, %v2069
  %v2405 = vmul.f32 %v2072, %v2072
  %v2406 = vmul.f32 %v2074, %v2074
  %v2407 = vmul.f32 %v2077, %v2077
  %v2408 = vmul.f32 %v2079, %v2079
  %v2409 = vmul.f32 %v2082, %v2082
  %v2410 = vmul.f32 %v2084, %v2084
  %v2411 = vmul.f32 %v2087, %v2087
  %v2412 = vmul.f32 %v2089, %v2089
  %v2413 = vmul.f32 %v2092, %v2092
  %v2414 = vmul.f32 %v2094, %v2094
  %v2415 = vmul.f32 %v2097, %v2097
  %v2416 = vmul.f32 %v2099, %v2099
  %v2417 = vmul.f32 %v2102, %v2102
  %v2418 = vmul.f32 %v2104, %v2104
  %v2419 = vmul.f32 %v2107, %v2107
  %v2420 = vmul.f32 %v2109, %v2109
  %v2421 = vmul.f32 %v2112, %v2112
  %v2422 = vmul.f32 %v2114, %v2114
  %v2423 = vmul.f32 %v2117, %v2117
  %v2424 = vmul.f32 %v2119, %v2119
  %v2425 = vmul.f32 %v2122, %v2122
  %v2426 = vmul.f32 %v2124, %v2124
  %v2427 = vmul.f32 %v2127, %v2127
  %v2428 = vmul.f32 %v2129, %v2129
  %v2429 = vmul.f32 %v2132, %v2132
  %v2430 = vmul.f32 %v2134, %v2134
  %v2431 = vmul.f32 %v2137, %v2137
  %v2432 = vmul.f32 %v2139, %v2139
  %v2433 = vmul.f32 %v2142, %v2142
  %v2434 = vmul.f32 %v2144, %v2144
  %v2435 = vmul.f32 %v2147, %v2147
  %v2436 = vmul.f32 %v2149, %v2149
  %v2437 = vmul.f32 %v2152, %v2152
  %v2438 = vmul.f32 %v2154, %v2154
  %v2439 = vmul.f32 %v2157, %v2157
  %v2440 = vmul.f32 %v2159, %v2159
  %v2441 = vmul.f32 %v2162, %v2162
  %v2442 = vmul.f32 %v2164, %v2164
  %v2443 = vmul.f32 %v2167, %v2167
  %v2444 = vmul.f32 %v2169, %v2169
  %v2445 = vmul.f32 %v2172, %v2172
  %v2446 = vmul.f32 %v2174, %v2174
  %v2447 = vmul.f32 %v2177, %v2177
  %v2448 = vmul.f32 %v2179, %v2179
  %v2449 = vmul.f32 %v2182, %v2182
  %v2450 = vmul.f32 %v2184, %v2184
  %v2451 = vmul.f32 %v2187, %v2187
  %v2452 = vmul.f32 %v2189, %v2189
  %v2453 = vadd.f32 %v2325, %v2326
  %v2454 = vadd.f32 %v2453, %v2327
  %v2455 = vadd.f32 %v2454, %v2328
  %v2456 = vadd.f32 %v2455, %v2329
  %v2457 = vadd.f32 %v2456, %v2330
  %v2458 = vadd.f32 %v2457, %v2331
  %v2459 = vadd.f32 %v2458, %v2332
  %v2460 = vadd.f32 %v2459, %v2333
  %v2461 = vadd.f32 %v2460, %v2334
  %v2462 = vadd.f32 %v2461, %v2335
  %v2463 = vadd.f32 %v2462, %v2336
  %v2464 = vadd.f32 %v2463, %v2337
  %v2465 = vadd.f32 %v2464, %v2338
  %v2466 = vadd.f32 %v2465, %v2339
  %v2467 = vadd.f32 %v2466, %v2340
  %v2468 = vadd.f32 %v2467, %v2341
  %v2469 = vadd.f32 %v2468, %v2342
  %v2470 = vadd.f32 %v2469, %v2343
  %v2471 = vadd.f32 %v2470, %v2344
  %v2472 = vadd.f32 %v2471, %v2345
  %v2473 = vadd.f32 %v2472, %v2346
  %v2474 = vadd.f32 %v2473, %v2347
  %v2475 = vadd.f32 %v2474, %v2348
  %v2476 = vadd.f32 %v2475, %v2349
  %v2477 = vadd.f32 %v2476, %v2350
  %v2478 = vadd.f32 %v2477, %v2351
  %v2479 = vadd.f32 %v2478, %v2352
  %v2480 = vadd.f32 %v2479, %v2353
  %v2481 = vadd.f32 %v2480, %v2354
  %v2482 = vadd.f32 %v2481, %v2355
  %v2483 = vadd.f32 %v2482, %v2356
  %v2484 = vadd.f32 %v2483, %v2357
  %v2485 = vadd.f32 %v2484, %v2358
  %v2486 = vadd.f32 %v2485, %v2359
  %v2487 = vadd.f32 %v2486, %v2360
  %v2488 = vadd.f32 %v2487, %v2361
  %v2489 = vadd.f32 %v2488, %v2362
  %v2490 = vadd.f32 %v2489, %v2363
  %v2491 = vadd.f32 %v2490, %v2364
  %v2492 = vadd.f32 %v2491, %v2365
  %v2493 = vadd.f32 %v2492, %v2366
  %v2494 = vadd.f32 %v2493, %v2367
  %v2495 = vadd.f32 %v2494, %v2368
  %v2496 = vadd.f32 %v2495, %v2369
  %v2497 = vadd.f32 %v2496, %v2370
  %v2498 = vadd.f32 %v2497, %v2371
  %v2499 = vadd.f32 %v2498, %v2372
  %v2500 = vadd.f32 %v2499, %v2373
  %v2501 = vadd.f32 %v2500, %v2374
  %v2502 = vadd.f32 %v2501, %v2375
  %v2503 = vadd.f32 %v2502, %v2376
  %v2504 = vadd.f32 %v2503, %v2377
  %v2505 = vadd.f32 %v2504, %v2378
  %v2506 = vadd.f32 %v2505, %v2379
  %v2507 = vadd.f32 %v2506, %v2380
  %v2508 = vadd.f32 %v2507, %v2381
  %v2509 = vadd.f32 %v2508, %v2382
  %v2510 = vadd.f32 %v2509, %v2383
  %v2511 = vadd.f32 %v2510, %v2384
  %v2512 = vadd.f32 %v2511, %v2385
  %v2513 = vadd.f32 %v2512, %v2386
  %v2514 = vadd.f32 %v2513, %v2387
  %v2515 = vadd.f32 %v2514, %v2388
  %v2516 = vadd.f32 %v2515, %v2389
  %v2517 = vadd.f32 %v2516, %v2390
  %v2518 = vadd.f32 %v2517, %v2391
  %v2519 = vadd.f32 %v2518, %v2392
  %v2520 = vadd.f32 %v2519, %v2393
  %v2521 = vadd.f32 %v2520, %v2394
  %v2522 = vadd.f32 %v2521, %v2395
  %v2523 = vadd.f32 %v2522, %v2396
  %v2524 = vadd.f32 %v2523, %v2397
  %v2525 = vadd.f32 %v2524, %v2398
  %v2526 = vadd.f32 %v2525, %v2399
  %v2527 = vadd.f32 %v2526, %v2400
  %v2528 = vadd.f32 %v2527, %v2401
  %v2529 = vadd.f32 %v2528, %v2402
  %v2530 = vadd.f32 %v2529, %v2403
  %v2531 = vadd.f32 %v2530, %v2404
  %v2532 = vadd.f32 %v2531, %v2405
  %v2533 = vadd.f32 %v2532, %v2406
  %v2534 = vadd.f32 %v2533, %v2407
  %v2535 = vadd.f32 %v2534, %v2408
  %v2536 = vadd.f32 %v2535, %v2409
  %v2537 = vadd.f32 %v2536, %v2410
  %v2538 = vadd.f32 %v2537, %v2411
  %v2539 = vadd.f32 %v2538, %v2412
  %v2540 = vadd.f32 %v2539, %v2413
  %v2541 = vadd.f32 %v2540, %v2414
  %v2542 = vadd.f32 %v2541, %v2415
  %v2543 = vadd.f32 %v2542, %v2416
  %v2544 = vadd.f32 %v2543, %v2417
  %v2545 = vadd.f32 %v2544, %v2418
  %v2546 = vadd.f32 %v2545, %v2419
  %v2547 = vadd.f32 %v2546, %v2420
  %v2548 = vadd.f32 %v2547, %v2421
  %v2549 = vadd.f32 %v2548, %v2422
  %v2550 = vadd.f32 %v2549, %v2423
  %v2551 = vadd.f32 %v2550, %v2424
  %v2552 = vadd.f32 %v2551, %v2425
  %v2553 = vadd.f32 %v2552, %v2426
  %v2554 = vadd.f32 %v2553, %v2427
  %v2555 = vadd.f32 %v2554, %v2428
  %v2556 = vadd.f32 %v2555, %v2429
  %v2557 = vadd.f32 %v2556, %v2430
  %v2558 = vadd.f32 %v2557, %v2431
  %v2559 = vadd.f32 %v2558, %v2432
  %v2560 = vadd.f32 %v2559, %v2433
  %v2561 = vadd.f32 %v2560, %v2434
  %v2562 = vadd.f32 %v2561, %v2435
  %v2563 = vadd.f32 %v2562, %v2436
  %v2564 = vadd.f32 %v2563, %v2437
  %v2565 = vadd.f32 %v2564, %v2438
  %v2566 = vadd.f32 %v2565, %v2439
  %v2567 = vadd.f32 %v2566, %v2440
  %v2568 = vadd.f32 %v2567, %v2441
  %v2569 = vadd.f32 %v2568, %v2442
  %v2570 = vadd.f32 %v2569, %v2443
  %v2571 = vadd.f32 %v2570, %v2444
  %v2572 = vadd.f32 %v2571, %v2445
  %v2573 = vadd.f32 %v2572, %v2446
  %v2574 = vadd.f32 %v2573, %v2447
  %v2575 = vadd.f32 %v2574, %v2448
  %v2576 = vadd.f32 %v2575, %v2449
  %v2577 = vadd.f32 %v2576, %v2450
  %v2578 = vadd.f32 %v2577, %v2451
  %v2579 = vadd.f32 %v2578, %v2452
  %v2580 = vrot.slane %v2579, 4
  %v2581 = vadd.f32 %v2579, %v2580
  %v2582 = vrot.slane %v2581, 2
  %v2583 = vadd.f32 %v2581, %v2582
  %v2584 = vrot.slane %v2583, 1
  %v2585 = vadd.f32 %v2583, %v2584
  %v2586 = vmul.f32 %v2585, 0.0009765625
  %v2587 = vmul.f32 %v2324, %v2324
  %v2588 = vsub.f32 %v2586, %v2587
  %v2589 = vmax.f32 %v2588, 0.0
  %v2590 = vadd.f32 %v2589, 1e-05
  %v2591 = vrsqrt.pop %v2590
  %v2592 = vmul.f32 %v2591, %v2590
  %v2593 = vmul.f32 %v2592, %v2591
  %v2594 = vmul.f32 0.5, %v2593
  %v2595 = vsub.f32 1.5, %v2594
  %v2596 = vmul.f32 %v2591, %v2595
  %vm2597 = vweird.f32 %v2590
  %vm2598 = vweird.f32 %v2591
  %vm2599 = vmor %vm2597, %vm2598
  %v2600 = vsel %vm2599, %v2591, %v2596
  %v2601 = vmul.f32 %v1813, %v2600
  %v2602 = vadd.f32 %v2324, %v1813
  %v2603 = vsub.f32 %v1813, %v2602
  %v2605 = vrot.slane %v2601, 1
  %v2607 = vmul.f32 %v2603, %v2605
  %v2609 = vrot.slane %v2607, 6
  %v2611 = vadd.f32 %v1813, %v2609
  %v2612 = vperm.slane %v2601, 1
  %v2613 = vmul.f32 %v1872, %v2612
  %v2614 = vmul.f32 %v1874, %v2612
  %v2615 = vmul.f32 %v1877, %v2612
  %v2616 = vmul.f32 %v1879, %v2612
  %v2617 = vmul.f32 %v1882, %v2612
  %v2618 = vmul.f32 %v1884, %v2612
  %v2619 = vmul.f32 %v1887, %v2612
  %v2620 = vmul.f32 %v1889, %v2612
  %v2621 = vmul.f32 %v1892, %v2612
  %v2622 = vmul.f32 %v1894, %v2612
  %v2623 = vmul.f32 %v1897, %v2612
  %v2624 = vmul.f32 %v1899, %v2612
  %v2625 = vmul.f32 %v1902, %v2612
  %v2626 = vmul.f32 %v1904, %v2612
  %v2627 = vmul.f32 %v1907, %v2612
  %v2628 = vmul.f32 %v1909, %v2612
  %v2629 = vmul.f32 %v1912, %v2612
  %v2630 = vmul.f32 %v1914, %v2612
  %v2631 = vmul.f32 %v1917, %v2612
  %v2632 = vmul.f32 %v1919, %v2612
  %v2633 = vmul.f32 %v1922, %v2612
  %v2634 = vmul.f32 %v1924, %v2612
  %v2635 = vmul.f32 %v1927, %v2612
  %v2636 = vmul.f32 %v1929, %v2612
  %v2637 = vmul.f32 %v1932, %v2612
  %v2638 = vmul.f32 %v1934, %v2612
  %v2639 = vmul.f32 %v1937, %v2612
  %v2640 = vmul.f32 %v1939, %v2612
  %v2641 = vmul.f32 %v1942, %v2612
  %v2642 = vmul.f32 %v1944, %v2612
  %v2643 = vmul.f32 %v1947, %v2612
  %v2644 = vmul.f32 %v1949, %v2612
  %v2645 = vmul.f32 %v1952, %v2612
  %v2646 = vmul.f32 %v1954, %v2612
  %v2647 = vmul.f32 %v1957, %v2612
  %v2648 = vmul.f32 %v1959, %v2612
  %v2649 = vmul.f32 %v1962, %v2612
  %v2650 = vmul.f32 %v1964, %v2612
  %v2651 = vmul.f32 %v1967, %v2612
  %v2652 = vmul.f32 %v1969, %v2612
  %v2653 = vmul.f32 %v1972, %v2612
  %v2654 = vmul.f32 %v1974, %v2612
  %v2655 = vmul.f32 %v1977, %v2612
  %v2656 = vmul.f32 %v1979, %v2612
  %v2657 = vmul.f32 %v1982, %v2612
  %v2658 = vmul.f32 %v1984, %v2612
  %v2659 = vmul.f32 %v1987, %v2612
  %v2660 = vmul.f32 %v1989, %v2612
  %v2661 = vmul.f32 %v1992, %v2612
  %v2662 = vmul.f32 %v1994, %v2612
  %v2663 = vmul.f32 %v1997, %v2612
  %v2664 = vmul.f32 %v1999, %v2612
  %v2665 = vmul.f32 %v2002, %v2612
  %v2666 = vmul.f32 %v2004, %v2612
  %v2667 = vmul.f32 %v2007, %v2612
  %v2668 = vmul.f32 %v2009, %v2612
  %v2669 = vmul.f32 %v2012, %v2612
  %v2670 = vmul.f32 %v2014, %v2612
  %v2671 = vmul.f32 %v2017, %v2612
  %v2672 = vmul.f32 %v2019, %v2612
  %v2673 = vmul.f32 %v2022, %v2612
  %v2674 = vmul.f32 %v2024, %v2612
  %v2675 = vmul.f32 %v2027, %v2612
  %v2676 = vmul.f32 %v2029, %v2612
  %v2677 = vmul.f32 %v2032, %v2612
  %v2678 = vmul.f32 %v2034, %v2612
  %v2679 = vmul.f32 %v2037, %v2612
  %v2680 = vmul.f32 %v2039, %v2612
  %v2681 = vmul.f32 %v2042, %v2612
  %v2682 = vmul.f32 %v2044, %v2612
  %v2683 = vmul.f32 %v2047, %v2612
  %v2684 = vmul.f32 %v2049, %v2612
  %v2685 = vmul.f32 %v2052, %v2612
  %v2686 = vmul.f32 %v2054, %v2612
  %v2687 = vmul.f32 %v2057, %v2612
  %v2688 = vmul.f32 %v2059, %v2612
  %v2689 = vmul.f32 %v2062, %v2612
  %v2690 = vmul.f32 %v2064, %v2612
  %v2691 = vmul.f32 %v2067, %v2612
  %v2692 = vmul.f32 %v2069, %v2612
  %v2693 = vmul.f32 %v2072, %v2612
  %v2694 = vmul.f32 %v2074, %v2612
  %v2695 = vmul.f32 %v2077, %v2612
  %v2696 = vmul.f32 %v2079, %v2612
  %v2697 = vmul.f32 %v2082, %v2612
  %v2698 = vmul.f32 %v2084, %v2612
  %v2699 = vmul.f32 %v2087, %v2612
  %v2700 = vmul.f32 %v2089, %v2612
  %v2701 = vmul.f32 %v2092, %v2612
  %v2702 = vmul.f32 %v2094, %v2612
  %v2703 = vmul.f32 %v2097, %v2612
  %v2704 = vmul.f32 %v2099, %v2612
  %v2705 = vmul.f32 %v2102, %v2612
  %v2706 = vmul.f32 %v2104, %v2612
  %v2707 = vmul.f32 %v2107, %v2612
  %v2708 = vmul.f32 %v2109, %v2612
  %v2709 = vmul.f32 %v2112, %v2612
  %v2710 = vmul.f32 %v2114, %v2612
  %v2711 = vmul.f32 %v2117, %v2612
  %v2712 = vmul.f32 %v2119, %v2612
  %v2713 = vmul.f32 %v2122, %v2612
  %v2714 = vmul.f32 %v2124, %v2612
  %v2715 = vmul.f32 %v2127, %v2612
  %v2716 = vmul.f32 %v2129, %v2612
  %v2717 = vmul.f32 %v2132, %v2612
  %v2718 = vmul.f32 %v2134, %v2612
  %v2719 = vmul.f32 %v2137, %v2612
  %v2720 = vmul.f32 %v2139, %v2612
  %v2721 = vmul.f32 %v2142, %v2612
  %v2722 = vmul.f32 %v2144, %v2612
  %v2723 = vmul.f32 %v2147, %v2612
  %v2724 = vmul.f32 %v2149, %v2612
  %v2725 = vmul.f32 %v2152, %v2612
  %v2726 = vmul.f32 %v2154, %v2612
  %v2727 = vmul.f32 %v2157, %v2612
  %v2728 = vmul.f32 %v2159, %v2612
  %v2729 = vmul.f32 %v2162, %v2612
  %v2730 = vmul.f32 %v2164, %v2612
  %v2731 = vmul.f32 %v2167, %v2612
  %v2732 = vmul.f32 %v2169, %v2612
  %v2733 = vmul.f32 %v2172, %v2612
  %v2734 = vmul.f32 %v2174, %v2612
  %v2735 = vmul.f32 %v2177, %v2612
  %v2736 = vmul.f32 %v2179, %v2612
  %v2737 = vmul.f32 %v2182, %v2612
  %v2738 = vmul.f32 %v2184, %v2612
  %v2739 = vmul.f32 %v2187, %v2612
  %v2740 = vmul.f32 %v2189, %v2612
  %v2741 = vperm.slane %v2611, 2
  %v2742 = vadd.f32 %v2613, %v2741
  %v2743 = vadd.f32 %v2614, %v2741
  %v2744 = vadd.f32 %v2615, %v2741
  %v2745 = vadd.f32 %v2616, %v2741
  %v2746 = vadd.f32 %v2617, %v2741
  %v2747 = vadd.f32 %v2618, %v2741
  %v2748 = vadd.f32 %v2619, %v2741
  %v2749 = vadd.f32 %v2620, %v2741
  %v2750 = vadd.f32 %v2621, %v2741
  %v2751 = vadd.f32 %v2622, %v2741
  %v2752 = vadd.f32 %v2623, %v2741
  %v2753 = vadd.f32 %v2624, %v2741
  %v2754 = vadd.f32 %v2625, %v2741
  %v2755 = vadd.f32 %v2626, %v2741
  %v2756 = vadd.f32 %v2627, %v2741
  %v2757 = vadd.f32 %v2628, %v2741
  %v2758 = vadd.f32 %v2629, %v2741
  %v2759 = vadd.f32 %v2630, %v2741
  %v2760 = vadd.f32 %v2631, %v2741
  %v2761 = vadd.f32 %v2632, %v2741
  %v2762 = vadd.f32 %v2633, %v2741
  %v2763 = vadd.f32 %v2634, %v2741
  %v2764 = vadd.f32 %v2635, %v2741
  %v2765 = vadd.f32 %v2636, %v2741
  %v2766 = vadd.f32 %v2637, %v2741
  %v2767 = vadd.f32 %v2638, %v2741
  %v2768 = vadd.f32 %v2639, %v2741
  %v2769 = vadd.f32 %v2640, %v2741
  %v2770 = vadd.f32 %v2641, %v2741
  %v2771 = vadd.f32 %v2642, %v2741
  %v2772 = vadd.f32 %v2643, %v2741
  %v2773 = vadd.f32 %v2644, %v2741
  %v2774 = vadd.f32 %v2645, %v2741
  %v2775 = vadd.f32 %v2646, %v2741
  %v2776 = vadd.f32 %v2647, %v2741
  %v2777 = vadd.f32 %v2648, %v2741
  %v2778 = vadd.f32 %v2649, %v2741
  %v2779 = vadd.f32 %v2650, %v2741
  %v2780 = vadd.f32 %v2651, %v2741
  %v2781 = vadd.f32 %v2652, %v2741
  %v2782 = vadd.f32 %v2653, %v2741
  %v2783 = vadd.f32 %v2654, %v2741
  %v2784 = vadd.f32 %v2655, %v2741
  %v2785 = vadd.f32 %v2656, %v2741
  %v2786 = vadd.f32 %v2657, %v2741
  %v2787 = vadd.f32 %v2658, %v2741
  %v2788 = vadd.f32 %v2659, %v2741
  %v2789 = vadd.f32 %v2660, %v2741
  %v2790 = vadd.f32 %v2661, %v2741
  %v2791 = vadd.f32 %v2662, %v2741
  %v2792 = vadd.f32 %v2663, %v2741
  %v2793 = vadd.f32 %v2664, %v2741
  %v2794 = vadd.f32 %v2665, %v2741
  %v2795 = vadd.f32 %v2666, %v2741
  %v2796 = vadd.f32 %v2667, %v2741
  %v2797 = vadd.f32 %v2668, %v2741
  %v2798 = vadd.f32 %v2669, %v2741
  %v2799 = vadd.f32 %v2670, %v2741
  %v2800 = vadd.f32 %v2671, %v2741
  %v2801 = vadd.f32 %v2672, %v2741
  %v2802 = vadd.f32 %v2673, %v2741
  %v2803 = vadd.f32 %v2674, %v2741
  %v2804 = vadd.f32 %v2675, %v2741
  %v2805 = vadd.f32 %v2676, %v2741
  %v2806 = vadd.f32 %v2677, %v2741
  %v2807 = vadd.f32 %v2678, %v2741
  %v2808 = vadd.f32 %v2679, %v2741
  %v2809 = vadd.f32 %v2680, %v2741
  %v2810 = vadd.f32 %v2681, %v2741
  %v2811 = vadd.f32 %v2682, %v2741
  %v2812 = vadd.f32 %v2683, %v2741
  %v2813 = vadd.f32 %v2684, %v2741
  %v2814 = vadd.f32 %v2685, %v2741
  %v2815 = vadd.f32 %v2686, %v2741
  %v2816 = vadd.f32 %v2687, %v2741
  %v2817 = vadd.f32 %v2688, %v2741
  %v2818 = vadd.f32 %v2689, %v2741
  %v2819 = vadd.f32 %v2690, %v2741
  %v2820 = vadd.f32 %v2691, %v2741
  %v2821 = vadd.f32 %v2692, %v2741
  %v2822 = vadd.f32 %v2693, %v2741
  %v2823 = vadd.f32 %v2694, %v2741
  %v2824 = vadd.f32 %v2695, %v2741
  %v2825 = vadd.f32 %v2696, %v2741
  %v2826 = vadd.f32 %v2697, %v2741
  %v2827 = vadd.f32 %v2698, %v2741
  %v2828 = vadd.f32 %v2699, %v2741
  %v2829 = vadd.f32 %v2700, %v2741
  %v2830 = vadd.f32 %v2701, %v2741
  %v2831 = vadd.f32 %v2702, %v2741
  %v2832 = vadd.f32 %v2703, %v2741
  %v2833 = vadd.f32 %v2704, %v2741
  %v2834 = vadd.f32 %v2705, %v2741
  %v2835 = vadd.f32 %v2706, %v2741
  %v2836 = vadd.f32 %v2707, %v2741
  %v2837 = vadd.f32 %v2708, %v2741
  %v2838 = vadd.f32 %v2709, %v2741
  %v2839 = vadd.f32 %v2710, %v2741
  %v2840 = vadd.f32 %v2711, %v2741
  %v2841 = vadd.f32 %v2712, %v2741
  %v2842 = vadd.f32 %v2713, %v2741
  %v2843 = vadd.f32 %v2714, %v2741
  %v2844 = vadd.f32 %v2715, %v2741
  %v2845 = vadd.f32 %v2716, %v2741
  %v2846 = vadd.f32 %v2717, %v2741
  %v2847 = vadd.f32 %v2718, %v2741
  %v2848 = vadd.f32 %v2719, %v2741
  %v2849 = vadd.f32 %v2720, %v2741
  %v2850 = vadd.f32 %v2721, %v2741
  %v2851 = vadd.f32 %v2722, %v2741
  %v2852 = vadd.f32 %v2723, %v2741
  %v2853 = vadd.f32 %v2724, %v2741
  %v2854 = vadd.f32 %v2725, %v2741
  %v2855 = vadd.f32 %v2726, %v2741
  %v2856 = vadd.f32 %v2727, %v2741
  %v2857 = vadd.f32 %v2728, %v2741
  %v2858 = vadd.f32 %v2729, %v2741
  %v2859 = vadd.f32 %v2730, %v2741
  %v2860 = vadd.f32 %v2731, %v2741
  %v2861 = vadd.f32 %v2732, %v2741
  %v2862 = vadd.f32 %v2733, %v2741
  %v2863 = vadd.f32 %v2734, %v2741
  %v2864 = vadd.f32 %v2735, %v2741
  %v2865 = vadd.f32 %v2736, %v2741
  %v2866 = vadd.f32 %v2737, %v2741
  %v2867 = vadd.f32 %v2738, %v2741
  %v2868 = vadd.f32 %v2739, %v2741
  %v2869 = vadd.f32 %v2740, %v2741
  %2870 = vst [vmem:[%s5] sm:$0xff] %v2742
  %2871 = vst [vmem:[%s5 + $0x8] sm:$0xff] %v2743
  %2872 = vst [vmem:[%s5 + $0x10] sm:$0xff] %v2744
  %2873 = vst [vmem:[%s5 + $0x18] sm:$0xff] %v2745
  %2874 = vst [vmem:[%s5 + $0x20] sm:$0xff] %v2746
  %2875 = vst [vmem:[%s5 + $0x28] sm:$0xff] %v2747
  %2876 = vst [vmem:[%s5 + $0x30] sm:$0xff] %v2748
  %2877 = vst [vmem:[%s5 + $0x38] sm:$0xff] %v2749
  %2878 = vst [vmem:[%s5 + $0x40] sm:$0xff] %v2750
  %2879 = vst [vmem:[%s5 + $0x48] sm:$0xff] %v2751
  %2880 = vst [vmem:[%s5 + $0x50] sm:$0xff] %v2752
  %2881 = vst [vmem:[%s5 + $0x58] sm:$0xff] %v2753
  %2882 = vst [vmem:[%s5 + $0x60] sm:$0xff] %v2754
  %2883 = vst [vmem:[%s5 + $0x68] sm:$0xff] %v2755
  %2884 = vst [vmem:[%s5 + $0x70] sm:$0xff] %v2756
  %2885 = vst [vmem:[%s5 + $0x78] sm:$0xff] %v2757
  %2886 = vst [vmem:[%s5 + $0x80] sm:$0xff] %v2758
  %2887 = vst [vmem:[%s5 + $0x88] sm:$0xff] %v2759
  %2888 = vst [vmem:[%s5 + $0x90] sm:$0xff] %v2760
  %2889 = vst [vmem:[%s5 + $0x98] sm:$0xff] %v2761
  %2890 = vst [vmem:[%s5 + $0xa0] sm:$0xff] %v2762
  %2891 = vst [vmem:[%s5 + $0xa8] sm:$0xff] %v2763
  %2892 = vst [vmem:[%s5 + $0xb0] sm:$0xff] %v2764
  %2893 = vst [vmem:[%s5 + $0xb8] sm:$0xff] %v2765
  %2894 = vst [vmem:[%s5 + $0xc0] sm:$0xff] %v2766
  %2895 = vst [vmem:[%s5 + $0xc8] sm:$0xff] %v2767
  %2896 = vst [vmem:[%s5 + $0xd0] sm:$0xff] %v2768
  %2897 = vst [vmem:[%s5 + $0xd8] sm:$0xff] %v2769
  %2898 = vst [vmem:[%s5 + $0xe0] sm:$0xff] %v2770
  %2899 = vst [vmem:[%s5 + $0xe8] sm:$0xff] %v2771
  %2900 = vst [vmem:[%s5 + $0xf0] sm:$0xff] %v2772
  %2901 = vst [vmem:[%s5 + $0xf8] sm:$0xff] %v2773
  %2902 = vst [vmem:[%s5 + $0x100] sm:$0xff] %v2774
  %2903 = vst [vmem:[%s5 + $0x108] sm:$0xff] %v2775
  %2904 = vst [vmem:[%s5 + $0x110] sm:$0xff] %v2776
  %2905 = vst [vmem:[%s5 + $0x118] sm:$0xff] %v2777
  %2906 = vst [vmem:[%s5 + $0x120] sm:$0xff] %v2778
  %2907 = vst [vmem:[%s5 + $0x128] sm:$0xff] %v2779
  %2908 = vst [vmem:[%s5 + $0x130] sm:$0xff] %v2780
  %2909 = vst [vmem:[%s5 + $0x138] sm:$0xff] %v2781
  %2910 = vst [vmem:[%s5 + $0x140] sm:$0xff] %v2782
  %2911 = vst [vmem:[%s5 + $0x148] sm:$0xff] %v2783
  %2912 = vst [vmem:[%s5 + $0x150] sm:$0xff] %v2784
  %2913 = vst [vmem:[%s5 + $0x158] sm:$0xff] %v2785
  %2914 = vst [vmem:[%s5 + $0x160] sm:$0xff] %v2786
  %2915 = vst [vmem:[%s5 + $0x168] sm:$0xff] %v2787
  %2916 = vst [vmem:[%s5 + $0x170] sm:$0xff] %v2788
  %2917 = vst [vmem:[%s5 + $0x178] sm:$0xff] %v2789
  %2918 = vst [vmem:[%s5 + $0x180] sm:$0xff] %v2790
  %2919 = vst [vmem:[%s5 + $0x188] sm:$0xff] %v2791
  %2920 = vst [vmem:[%s5 + $0x190] sm:$0xff] %v2792
  %2921 = vst [vmem:[%s5 + $0x198] sm:$0xff] %v2793
  %2922 = vst [vmem:[%s5 + $0x1a0] sm:$0xff] %v2794
  %2923 = vst [vmem:[%s5 + $0x1a8] sm:$0xff] %v2795
  %2924 = vst [vmem:[%s5 + $0x1b0] sm:$0xff] %v2796
  %2925 = vst [vmem:[%s5 + $0x1b8] sm:$0xff] %v2797
  %2926 = vst [vmem:[%s5 + $0x1c0] sm:$0xff] %v2798
  %2927 = vst [vmem:[%s5 + $0x1c8] sm:$0xff] %v2799
  %2928 = vst [vmem:[%s5 + $0x1d0] sm:$0xff] %v2800
  %2929 = vst [vmem:[%s5 + $0x1d8] sm:$0xff] %v2801
  %2930 = vst [vmem:[%s5 + $0x1e0] sm:$0xff] %v2802
  %2931 = vst [vmem:[%s5 + $0x1e8] sm:$0xff] %v2803
  %2932 = vst [vmem:[%s5 + $0x1f0] sm:$0xff] %v2804
  %2933 = vst [vmem:[%s5 + $0x1f8] sm:$0xff] %v2805
  %2934 = vst [vmem:[%s5 + $0x200] sm:$0xff] %v2806
  %2935 = vst [vmem:[%s5 + $0x208] sm:$0xff] %v2807
  %2936 = vst [vmem:[%s5 + $0x210] sm:$0xff] %v2808
  %2937 = vst [vmem:[%s5 + $0x218] sm:$0xff] %v2809
  %2938 = vst [vmem:[%s5 + $0x220] sm:$0xff] %v2810
  %2939 = vst [vmem:[%s5 + $0x228] sm:$0xff] %v2811
  %2940 = vst [vmem:[%s5 + $0x230] sm:$0xff] %v2812
  %2941 = vst [vmem:[%s5 + $0x238] sm:$0xff] %v2813
  %2942 = vst [vmem:[%s5 + $0x240] sm:$0xff] %v2814
  %2943 = vst [vmem:[%s5 + $0x248] sm:$0xff] %v2815
  %2944 = vst [vmem:[%s5 + $0x250] sm:$0xff] %v2816
  %2945 = vst [vmem:[%s5 + $0x258] sm:$0xff] %v2817
  %2946 = vst [vmem:[%s5 + $0x260] sm:$0xff] %v2818
  %2947 = vst [vmem:[%s5 + $0x268] sm:$0xff] %v2819
  %2948 = vst [vmem:[%s5 + $0x270] sm:$0xff] %v2820
  %2949 = vst [vmem:[%s5 + $0x278] sm:$0xff] %v2821
  %2950 = vst [vmem:[%s5 + $0x280] sm:$0xff] %v2822
  %2951 = vst [vmem:[%s5 + $0x288] sm:$0xff] %v2823
  %2952 = vst [vmem:[%s5 + $0x290] sm:$0xff] %v2824
  %2953 = vst [vmem:[%s5 + $0x298] sm:$0xff] %v2825
  %2954 = vst [vmem:[%s5 + $0x2a0] sm:$0xff] %v2826
  %2955 = vst [vmem:[%s5 + $0x2a8] sm:$0xff] %v2827
  %2956 = vst [vmem:[%s5 + $0x2b0] sm:$0xff] %v2828
  %2957 = vst [vmem:[%s5 + $0x2b8] sm:$0xff] %v2829
  %2958 = vst [vmem:[%s5 + $0x2c0] sm:$0xff] %v2830
  %2959 = vst [vmem:[%s5 + $0x2c8] sm:$0xff] %v2831
  %2960 = vst [vmem:[%s5 + $0x2d0] sm:$0xff] %v2832
  %2961 = vst [vmem:[%s5 + $0x2d8] sm:$0xff] %v2833
  %2962 = vst [vmem:[%s5 + $0x2e0] sm:$0xff] %v2834
  %2963 = vst [vmem:[%s5 + $0x2e8] sm:$0xff] %v2835
  %2964 = vst [vmem:[%s5 + $0x2f0] sm:$0xff] %v2836
  %2965 = vst [vmem:[%s5 + $0x2f8] sm:$0xff] %v2837
  %2966 = vst [vmem:[%s5 + $0x300] sm:$0xff] %v2838
  %2967 = vst [vmem:[%s5 + $0x308] sm:$0xff] %v2839
  %2968 = vst [vmem:[%s5 + $0x310] sm:$0xff] %v2840
  %2969 = vst [vmem:[%s5 + $0x318] sm:$0xff] %v2841
  %2970 = vst [vmem:[%s5 + $0x320] sm:$0xff] %v2842
  %2971 = vst [vmem:[%s5 + $0x328] sm:$0xff] %v2843
  %2972 = vst [vmem:[%s5 + $0x330] sm:$0xff] %v2844
  %2973 = vst [vmem:[%s5 + $0x338] sm:$0xff] %v2845
  %2974 = vst [vmem:[%s5 + $0x340] sm:$0xff] %v2846
  %2975 = vst [vmem:[%s5 + $0x348] sm:$0xff] %v2847
  %2976 = vst [vmem:[%s5 + $0x350] sm:$0xff] %v2848
  %2977 = vst [vmem:[%s5 + $0x358] sm:$0xff] %v2849
  %2978 = vst [vmem:[%s5 + $0x360] sm:$0xff] %v2850
  %2979 = vst [vmem:[%s5 + $0x368] sm:$0xff] %v2851
  %2980 = vst [vmem:[%s5 + $0x370] sm:$0xff] %v2852
  %2981 = vst [vmem:[%s5 + $0x378] sm:$0xff] %v2853
  %2982 = vst [vmem:[%s5 + $0x380] sm:$0xff] %v2854
  %2983 = vst [vmem:[%s5 + $0x388] sm:$0xff] %v2855
  %2984 = vst [vmem:[%s5 + $0x390] sm:$0xff] %v2856
  %2985 = vst [vmem:[%s5 + $0x398] sm:$0xff] %v2857
  %2986 = vst [vmem:[%s5 + $0x3a0] sm:$0xff] %v2858
  %2987 = vst [vmem:[%s5 + $0x3a8] sm:$0xff] %v2859
  %2988 = vst [vmem:[%s5 + $0x3b0] sm:$0xff] %v2860
  %2989 = vst [vmem:[%s5 + $0x3b8] sm:$0xff] %v2861
  %2990 = vst [vmem:[%s5 + $0x3c0] sm:$0xff] %v2862
  %2991 = vst [vmem:[%s5 + $0x3c8] sm:$0xff] %v2863
  %2992 = vst [vmem:[%s5 + $0x3d0] sm:$0xff] %v2864
  %2993 = vst [vmem:[%s5 + $0x3d8] sm:$0xff] %v2865
  %2994 = vst [vmem:[%s5 + $0x3e0] sm:$0xff] %v2866
  %2995 = vst [vmem:[%s5 + $0x3e8] sm:$0xff] %v2867
  %2996 = vst [vmem:[%s5 + $0x3f0] sm:$0xff] %v2868
  %2997 = vst [vmem:[%s5 + $0x3f8] sm:$0xff] %v2869
  // Predicated region
  $region22: #{base_learner_forward.1} parent=0 // pred_check
    _
  $region23: #{base_learner_forward.1} parent=0 // pred_check_branch
    %2999 = sbr.rel (0) target = $region25
  $region24: #{base_learner_forward.1} parent=0 // pred_region
    _
  $region25: #{base_learner_forward.1} parent=0 // pred_fallthru
    _
  // Predicated region
  $region26: #{base_learner_forward.1} parent=0 // pred_check
    _
  $region27: #{base_learner_forward.1} parent=0 // pred_check_branch
    %3001 = sbr.rel (0) target = $region29
  $region28: #{base_learner_forward.1} parent=0 // pred_region
    _
  $region29: #{base_learner_forward.1} parent=0 // pred_fallthru
    _

</llo_original>
